<compile_context>
chip_gen: v7x
topology: tpu7x:2x2x1
jax: 0.10.0
libtpu: 0.0.40
codegen_flags: <defaults>
</compile_context>

<pallas_src>
import functools

import jax
import jax.numpy as jnp
import numpy as np
from jax.experimental import pallas as pl
from jax.experimental.pallas import tpu as pltpu


def _round_up(x, m):
    return ((x + m - 1) // m) * m


def _kn1x1_pool_kernel(x_ref, w_ref, b_ref, o_ref, *, eps, cin, cout):
    """One (batch, pixel-tile) grid step.

    x_ref: (1, 4*cin, TPr, 128) VMEM  -- plane [s*cin + c] = window-pixel s, channel c
    w_ref: (cout*cin,)          SMEM  -- w[d*cin + c]
    b_ref: (cout,)              SMEM
    o_ref: (1, cout, TPr, 128)  VMEM
    """
    inv_c = 1.0 / cin
    # Hoist the 32 scalar weight loads out of the 2x2-window loop.
    w = [[w_ref[d * cin + c] for c in range(cin)] for d in range(cout)]

    acc = [None] * cout
    for s in range(4):  # the 4 pixels of each 2x2 pooling window (unrolled)
        # ReLU on dense per-channel planes.
        xs = [jnp.maximum(x_ref[0, s * cin + c].astype(jnp.float32), 0.0)
              for c in range(cin)]

        # KernelNorm for a 1x1 kernel: per-pixel mean/var over the channel support,
        # computed as dense plane adds (full sublane + lane utilization).
        ssum = xs[0]
        for c in range(1, cin):
            ssum = ssum + xs[c]
        mean = ssum * inv_c
        xc = [xs[c] - mean for c in range(cin)]
        vsum = xc[0] * xc[0]
        for c in range(1, cin):
            vsum = vsum + xc[c] * xc[c]
        inv_std = jax.lax.rsqrt(vsum * inv_c + eps)          # EUP
        xn = [xc[c] * inv_std for c in range(cin)]           # cheaper than scaling Cout outs

        # 1x1 conv: Cout x Cin scalar-times-plane FMAs on the VPU, fused with the
        # MaxPool2d(2,2) elementwise max over the window pixels.
        for d in range(cout):
            y = w[d][0] * xn[0]
            for c in range(1, cin):
                y = y + w[d][c] * xn[c]
            acc[d] = y if s == 0 else jnp.maximum(acc[d], y)

    # Bias hoisted out of the pooling max (max(a+b, c+b) == max(a, c) + b).
    for d in range(cout):
        o_ref[0, d] = (acc[d] + b_ref[d]).astype(o_ref.dtype)


def trans_block_kn1x1(x_nchw, weight, bias, *, eps=1e-5, tile_p=8192):
    """weight: (Cin, Cout), bias: (Cout,).  Returns NCHW output (N, Cout, H//2, W//2)."""
    N, C, H, W = x_nchw.shape
    assert H % 2 == 0 and W % 2 == 0, "MaxPool2d(2,2) needs even spatial dims"
    Cin, Cout = weight.shape
    assert Cin == C
    H2, W2 = H // 2, W // 2
    PS = H2 * W2

    # --- glue: NCHW -> (N, 4*Cin, PS); the leading 4 enumerates the 2x2 window pixels ---
    xw = x_nchw.reshape(N, C, H2, 2, W2, 2)
    xw = jnp.transpose(xw, (0, 3, 5, 1, 2, 4))            # (N, 2, 2, C, H2, W2)
    xw = xw.reshape(N, 4 * C, PS)

    # Tile the pixel axis; keep it dense over (sublane, lane) = (TPr, 128).
    assert tile_p % 128 == 0, "tile_p must be a multiple of 128"
    TP = min(tile_p, _round_up(PS, 128))
    PS_pad = _round_up(PS, TP)
    if PS_pad != PS:
        xw = jnp.pad(xw, ((0, 0), (0, 0), (0, PS_pad - PS)))
    PR = PS_pad // 128
    TPr = TP // 128
    xw = xw.reshape(N, 4 * C, PR, 128)

    # Flat scalar tables for SMEM: w_flat[d*Cin + c], bias[d].
    w_flat = jnp.transpose(weight).reshape(-1).astype(jnp.float32)   # (Cout*Cin,)
    b_flat = bias.reshape(-1).astype(jnp.float32)                    # (Cout,)

    kernel = functools.partial(_kn1x1_pool_kernel, eps=eps, cin=Cin, cout=Cout)
    out = pl.pallas_call(
        kernel,
        grid=(N, PS_pad // TP),
        in_specs=[
            pl.BlockSpec((1, 4 * C, TPr, 128), lambda n, p: (n, 0, p, 0)),
            pl.BlockSpec(memory_space=pltpu.MemorySpace.SMEM),
            pl.BlockSpec(memory_space=pltpu.MemorySpace.SMEM),
        ],
        out_specs=pl.BlockSpec((1, Cout, TPr, 128), lambda n, p: (n, 0, p, 0)),
        out_shape=jax.ShapeDtypeStruct((N, Cout, PR, 128), x_nchw.dtype),
        compiler_params=pltpu.CompilerParams(
            dimension_semantics=("parallel", "parallel")),
    )(xw, w_flat, b_flat)

    out = out.reshape(N, Cout, PS_pad)
    if PS_pad != PS:
        out = out[:, :, :PS]
    # (N, Cout, PS) is already NCHW pixel order -> free logical reshape.
    return out.reshape(N, Cout, H2, W2)


def reference_forward(x_nchw, weight, bias, eps=1e-5):
    """Pure-JAX reference matching the PyTorch module (eval mode)."""
    x = jnp.maximum(x_nchw, 0.0)
    mean = jnp.mean(x, axis=1, keepdims=True)
    var = jnp.mean(jnp.square(x - mean), axis=1, keepdims=True)
    xn = (x - mean) * jax.lax.rsqrt(var + eps)
    y = jnp.einsum("nchw,cd->ndhw", xn, weight) + bias.reshape(1, -1, 1, 1)
    N, D, H, W = y.shape
    y = y.reshape(N, D, H // 2, 2, W // 2, 2)
    return jnp.max(y, axis=(3, 5))


if __name__ == "__main__":
    in_channels, out_channels = 4, 8
    N, H, W = 2, 16, 16

    key = jax.random.PRNGKey(0)
    kx, kw, kb = jax.random.split(key, 3)
    x = jax.random.normal(kx, (N, in_channels, H, W), dtype=jnp.float32)
    weight = jax.random.normal(kw, (in_channels, out_channels), dtype=jnp.float32)
    weight = weight * (2.0 / in_channels) ** 0.5
    bias = jax.random.normal(kb, (out_channels,), dtype=jnp.float32) * 0.01

    fwd = jax.jit(trans_block_kn1x1)
    out = fwd(x, weight, bias)
    out = jax.block_until_ready(out)

    ref = reference_forward(x, weight, bias)
    assert out.shape == (N, out_channels, H // 2, W // 2), out.shape
    np.testing.assert_allclose(np.asarray(out), np.asarray(ref), rtol=1e-4, atol=1e-4)

    print("KERNEL_OK")
</pallas_src>

<mosaic_0001>
module attributes {stable_mosaic.version = 11 : i64} {
  func.func @_kn1x1_pool_kernel(%arg0: i32, %arg1: i32, %arg2: memref<1x16x1x128xf32, #tpu.memory_space<vmem>>, %arg3: memref<32xf32, #tpu.memory_space<smem>>, %arg4: memref<8xf32, #tpu.memory_space<smem>>, %arg5: memref<1x8x1x128xf32, #tpu.memory_space<vmem>>) attributes {dimension_semantics = [#tpu.dimension_semantics<parallel>, #tpu.dimension_semantics<parallel>], iteration_bounds = array<i64: 2, 1>, scalar_prefetch = 0 : i64, scratch_operands = 0 : i64, tpu.core_type = #tpu.core_type<tc>, window_params = [{transform_indices = @transform_0, window_bounds = array<i64: 1, 16, 1, 128>}, {transform_indices = @transform_1, window_bounds = array<i64: 32>}, {transform_indices = @transform_2, window_bounds = array<i64: 8>}, {transform_indices = @transform_3, window_bounds = array<i64: 1, 8, 1, 128>}]} {
    %c0 = arith.constant 0 : index
    %0 = memref.load %arg3[%c0] : memref<32xf32, #tpu.memory_space<smem>>
    %c1 = arith.constant 1 : index
    %1 = memref.load %arg3[%c1] : memref<32xf32, #tpu.memory_space<smem>>
    %c2 = arith.constant 2 : index
    %2 = memref.load %arg3[%c2] : memref<32xf32, #tpu.memory_space<smem>>
    %c3 = arith.constant 3 : index
    %3 = memref.load %arg3[%c3] : memref<32xf32, #tpu.memory_space<smem>>
    %c4 = arith.constant 4 : index
    %4 = memref.load %arg3[%c4] : memref<32xf32, #tpu.memory_space<smem>>
    %c5 = arith.constant 5 : index
    %5 = memref.load %arg3[%c5] : memref<32xf32, #tpu.memory_space<smem>>
    %c6 = arith.constant 6 : index
    %6 = memref.load %arg3[%c6] : memref<32xf32, #tpu.memory_space<smem>>
    %c7 = arith.constant 7 : index
    %7 = memref.load %arg3[%c7] : memref<32xf32, #tpu.memory_space<smem>>
    %c8 = arith.constant 8 : index
    %8 = memref.load %arg3[%c8] : memref<32xf32, #tpu.memory_space<smem>>
    %c9 = arith.constant 9 : index
    %9 = memref.load %arg3[%c9] : memref<32xf32, #tpu.memory_space<smem>>
    %c10 = arith.constant 10 : index
    %10 = memref.load %arg3[%c10] : memref<32xf32, #tpu.memory_space<smem>>
    %c11 = arith.constant 11 : index
    %11 = memref.load %arg3[%c11] : memref<32xf32, #tpu.memory_space<smem>>
    %c12 = arith.constant 12 : index
    %12 = memref.load %arg3[%c12] : memref<32xf32, #tpu.memory_space<smem>>
    %c13 = arith.constant 13 : index
    %13 = memref.load %arg3[%c13] : memref<32xf32, #tpu.memory_space<smem>>
    %c14 = arith.constant 14 : index
    %14 = memref.load %arg3[%c14] : memref<32xf32, #tpu.memory_space<smem>>
    %c15 = arith.constant 15 : index
    %15 = memref.load %arg3[%c15] : memref<32xf32, #tpu.memory_space<smem>>
    %c16 = arith.constant 16 : index
    %16 = memref.load %arg3[%c16] : memref<32xf32, #tpu.memory_space<smem>>
    %c17 = arith.constant 17 : index
    %17 = memref.load %arg3[%c17] : memref<32xf32, #tpu.memory_space<smem>>
    %c18 = arith.constant 18 : index
    %18 = memref.load %arg3[%c18] : memref<32xf32, #tpu.memory_space<smem>>
    %c19 = arith.constant 19 : index
    %19 = memref.load %arg3[%c19] : memref<32xf32, #tpu.memory_space<smem>>
    %c20 = arith.constant 20 : index
    %20 = memref.load %arg3[%c20] : memref<32xf32, #tpu.memory_space<smem>>
    %c21 = arith.constant 21 : index
    %21 = memref.load %arg3[%c21] : memref<32xf32, #tpu.memory_space<smem>>
    %c22 = arith.constant 22 : index
    %22 = memref.load %arg3[%c22] : memref<32xf32, #tpu.memory_space<smem>>
    %c23 = arith.constant 23 : index
    %23 = memref.load %arg3[%c23] : memref<32xf32, #tpu.memory_space<smem>>
    %c24 = arith.constant 24 : index
    %24 = memref.load %arg3[%c24] : memref<32xf32, #tpu.memory_space<smem>>
    %c25 = arith.constant 25 : index
    %25 = memref.load %arg3[%c25] : memref<32xf32, #tpu.memory_space<smem>>
    %c26 = arith.constant 26 : index
    %26 = memref.load %arg3[%c26] : memref<32xf32, #tpu.memory_space<smem>>
    %c27 = arith.constant 27 : index
    %27 = memref.load %arg3[%c27] : memref<32xf32, #tpu.memory_space<smem>>
    %c28 = arith.constant 28 : index
    %28 = memref.load %arg3[%c28] : memref<32xf32, #tpu.memory_space<smem>>
    %c29 = arith.constant 29 : index
    %29 = memref.load %arg3[%c29] : memref<32xf32, #tpu.memory_space<smem>>
    %c30 = arith.constant 30 : index
    %30 = memref.load %arg3[%c30] : memref<32xf32, #tpu.memory_space<smem>>
    %c31 = arith.constant 31 : index
    %31 = memref.load %arg3[%c31] : memref<32xf32, #tpu.memory_space<smem>>
    %c0_0 = arith.constant 0 : index
    %c0_1 = arith.constant 0 : index
    %c0_2 = arith.constant 0 : index
    %c0_3 = arith.constant 0 : index
    %32 = vector.load %arg2[%c0_0, %c0_1, %c0_2, %c0_3] : memref<1x16x1x128xf32, #tpu.memory_space<vmem>>, vector<1x1x1x128xf32>
    %33 = vector.shape_cast %32 : vector<1x1x1x128xf32> to vector<1x128xf32>
    %cst = arith.constant 0.000000e+00 : f32
    %34 = vector.broadcast %cst : f32 to vector<1x128xf32>
    %35 = arith.maximumf %33, %34 : vector<1x128xf32>
    %c0_4 = arith.constant 0 : index
    %c1_5 = arith.constant 1 : index
    %c0_6 = arith.constant 0 : index
    %c0_7 = arith.constant 0 : index
    %36 = vector.load %arg2[%c0_4, %c1_5, %c0_6, %c0_7] : memref<1x16x1x128xf32, #tpu.memory_space<vmem>>, vector<1x1x1x128xf32>
    %37 = vector.shape_cast %36 : vector<1x1x1x128xf32> to vector<1x128xf32>
    %cst_8 = arith.constant 0.000000e+00 : f32
    %38 = vector.broadcast %cst_8 : f32 to vector<1x128xf32>
    %39 = arith.maximumf %37, %38 : vector<1x128xf32>
    %c0_9 = arith.constant 0 : index
    %c2_10 = arith.constant 2 : index
    %c0_11 = arith.constant 0 : index
    %c0_12 = arith.constant 0 : index
    %40 = vector.load %arg2[%c0_9, %c2_10, %c0_11, %c0_12] : memref<1x16x1x128xf32, #tpu.memory_space<vmem>>, vector<1x1x1x128xf32>
    %41 = vector.shape_cast %40 : vector<1x1x1x128xf32> to vector<1x128xf32>
    %cst_13 = arith.constant 0.000000e+00 : f32
    %42 = vector.broadcast %cst_13 : f32 to vector<1x128xf32>
    %43 = arith.maximumf %41, %42 : vector<1x128xf32>
    %c0_14 = arith.constant 0 : index
    %c3_15 = arith.constant 3 : index
    %c0_16 = arith.constant 0 : index
    %c0_17 = arith.constant 0 : index
    %44 = vector.load %arg2[%c0_14, %c3_15, %c0_16, %c0_17] : memref<1x16x1x128xf32, #tpu.memory_space<vmem>>, vector<1x1x1x128xf32>
    %45 = vector.shape_cast %44 : vector<1x1x1x128xf32> to vector<1x128xf32>
    %cst_18 = arith.constant 0.000000e+00 : f32
    %46 = vector.broadcast %cst_18 : f32 to vector<1x128xf32>
    %47 = arith.maximumf %45, %46 : vector<1x128xf32>
    %48 = arith.addf %35, %39 : vector<1x128xf32>
    %49 = arith.addf %48, %43 : vector<1x128xf32>
    %50 = arith.addf %49, %47 : vector<1x128xf32>
    %cst_19 = arith.constant 2.500000e-01 : f32
    %51 = vector.broadcast %cst_19 : f32 to vector<1x128xf32>
    %52 = arith.mulf %50, %51 : vector<1x128xf32>
    %53 = arith.subf %35, %52 : vector<1x128xf32>
    %54 = arith.subf %39, %52 : vector<1x128xf32>
    %55 = arith.subf %43, %52 : vector<1x128xf32>
    %56 = arith.subf %47, %52 : vector<1x128xf32>
    %57 = arith.mulf %53, %53 : vector<1x128xf32>
    %58 = arith.mulf %54, %54 : vector<1x128xf32>
    %59 = arith.addf %57, %58 : vector<1x128xf32>
    %60 = arith.mulf %55, %55 : vector<1x128xf32>
    %61 = arith.addf %59, %60 : vector<1x128xf32>
    %62 = arith.mulf %56, %56 : vector<1x128xf32>
    %63 = arith.addf %61, %62 : vector<1x128xf32>
    %cst_20 = arith.constant 2.500000e-01 : f32
    %64 = vector.broadcast %cst_20 : f32 to vector<1x128xf32>
    %65 = arith.mulf %63, %64 : vector<1x128xf32>
    %cst_21 = arith.constant 9.99999974E-6 : f32
    %66 = vector.broadcast %cst_21 : f32 to vector<1x128xf32>
    %67 = arith.addf %65, %66 : vector<1x128xf32>
    %68 = math.rsqrt %67 : vector<1x128xf32>
    %69 = arith.mulf %53, %68 : vector<1x128xf32>
    %70 = arith.mulf %54, %68 : vector<1x128xf32>
    %71 = arith.mulf %55, %68 : vector<1x128xf32>
    %72 = arith.mulf %56, %68 : vector<1x128xf32>
    %73 = vector.broadcast %0 : f32 to vector<1x128xf32>
    %74 = arith.mulf %73, %69 : vector<1x128xf32>
    %75 = vector.broadcast %1 : f32 to vector<1x128xf32>
    %76 = arith.mulf %75, %70 : vector<1x128xf32>
    %77 = arith.addf %74, %76 : vector<1x128xf32>
    %78 = vector.broadcast %2 : f32 to vector<1x128xf32>
    %79 = arith.mulf %78, %71 : vector<1x128xf32>
    %80 = arith.addf %77, %79 : vector<1x128xf32>
    %81 = vector.broadcast %3 : f32 to vector<1x128xf32>
    %82 = arith.mulf %81, %72 : vector<1x128xf32>
    %83 = arith.addf %80, %82 : vector<1x128xf32>
    %84 = vector.broadcast %4 : f32 to vector<1x128xf32>
    %85 = arith.mulf %84, %69 : vector<1x128xf32>
    %86 = vector.broadcast %5 : f32 to vector<1x128xf32>
    %87 = arith.mulf %86, %70 : vector<1x128xf32>
    %88 = arith.addf %85, %87 : vector<1x128xf32>
    %89 = vector.broadcast %6 : f32 to vector<1x128xf32>
    %90 = arith.mulf %89, %71 : vector<1x128xf32>
    %91 = arith.addf %88, %90 : vector<1x128xf32>
    %92 = vector.broadcast %7 : f32 to vector<1x128xf32>
    %93 = arith.mulf %92, %72 : vector<1x128xf32>
    %94 = arith.addf %91, %93 : vector<1x128xf32>
    %95 = vector.broadcast %8 : f32 to vector<1x128xf32>
    %96 = arith.mulf %95, %69 : vector<1x128xf32>
    %97 = vector.broadcast %9 : f32 to vector<1x128xf32>
    %98 = arith.mulf %97, %70 : vector<1x128xf32>
    %99 = arith.addf %96, %98 : vector<1x128xf32>
    %100 = vector.broadcast %10 : f32 to vector<1x128xf32>
    %101 = arith.mulf %100, %71 : vector<1x128xf32>
    %102 = arith.addf %99, %101 : vector<1x128xf32>
    %103 = vector.broadcast %11 : f32 to vector<1x128xf32>
    %104 = arith.mulf %103, %72 : vector<1x128xf32>
    %105 = arith.addf %102, %104 : vector<1x128xf32>
    %106 = vector.broadcast %12 : f32 to vector<1x128xf32>
    %107 = arith.mulf %106, %69 : vector<1x128xf32>
    %108 = vector.broadcast %13 : f32 to vector<1x128xf32>
    %109 = arith.mulf %108, %70 : vector<1x128xf32>
    %110 = arith.addf %107, %109 : vector<1x128xf32>
    %111 = vector.broadcast %14 : f32 to vector<1x128xf32>
    %112 = arith.mulf %111, %71 : vector<1x128xf32>
    %113 = arith.addf %110, %112 : vector<1x128xf32>
    %114 = vector.broadcast %15 : f32 to vector<1x128xf32>
    %115 = arith.mulf %114, %72 : vector<1x128xf32>
    %116 = arith.addf %113, %115 : vector<1x128xf32>
    %117 = vector.broadcast %16 : f32 to vector<1x128xf32>
    %118 = arith.mulf %117, %69 : vector<1x128xf32>
    %119 = vector.broadcast %17 : f32 to vector<1x128xf32>
    %120 = arith.mulf %119, %70 : vector<1x128xf32>
    %121 = arith.addf %118, %120 : vector<1x128xf32>
    %122 = vector.broadcast %18 : f32 to vector<1x128xf32>
    %123 = arith.mulf %122, %71 : vector<1x128xf32>
    %124 = arith.addf %121, %123 : vector<1x128xf32>
    %125 = vector.broadcast %19 : f32 to vector<1x128xf32>
    %126 = arith.mulf %125, %72 : vector<1x128xf32>
    %127 = arith.addf %124, %126 : vector<1x128xf32>
    %128 = vector.broadcast %20 : f32 to vector<1x128xf32>
    %129 = arith.mulf %128, %69 : vector<1x128xf32>
    %130 = vector.broadcast %21 : f32 to vector<1x128xf32>
    %131 = arith.mulf %130, %70 : vector<1x128xf32>
    %132 = arith.addf %129, %131 : vector<1x128xf32>
    %133 = vector.broadcast %22 : f32 to vector<1x128xf32>
    %134 = arith.mulf %133, %71 : vector<1x128xf32>
    %135 = arith.addf %132, %134 : vector<1x128xf32>
    %136 = vector.broadcast %23 : f32 to vector<1x128xf32>
    %137 = arith.mulf %136, %72 : vector<1x128xf32>
    %138 = arith.addf %135, %137 : vector<1x128xf32>
    %139 = vector.broadcast %24 : f32 to vector<1x128xf32>
    %140 = arith.mulf %139, %69 : vector<1x128xf32>
    %141 = vector.broadcast %25 : f32 to vector<1x128xf32>
    %142 = arith.mulf %141, %70 : vector<1x128xf32>
    %143 = arith.addf %140, %142 : vector<1x128xf32>
    %144 = vector.broadcast %26 : f32 to vector<1x128xf32>
    %145 = arith.mulf %144, %71 : vector<1x128xf32>
    %146 = arith.addf %143, %145 : vector<1x128xf32>
    %147 = vector.broadcast %27 : f32 to vector<1x128xf32>
    %148 = arith.mulf %147, %72 : vector<1x128xf32>
    %149 = arith.addf %146, %148 : vector<1x128xf32>
    %150 = vector.broadcast %28 : f32 to vector<1x128xf32>
    %151 = arith.mulf %150, %69 : vector<1x128xf32>
    %152 = vector.broadcast %29 : f32 to vector<1x128xf32>
    %153 = arith.mulf %152, %70 : vector<1x128xf32>
    %154 = arith.addf %151, %153 : vector<1x128xf32>
    %155 = vector.broadcast %30 : f32 to vector<1x128xf32>
    %156 = arith.mulf %155, %71 : vector<1x128xf32>
    %157 = arith.addf %154, %156 : vector<1x128xf32>
    %158 = vector.broadcast %31 : f32 to vector<1x128xf32>
    %159 = arith.mulf %158, %72 : vector<1x128xf32>
    %160 = arith.addf %157, %159 : vector<1x128xf32>
    %c0_22 = arith.constant 0 : index
    %c4_23 = arith.constant 4 : index
    %c0_24 = arith.constant 0 : index
    %c0_25 = arith.constant 0 : index
    %161 = vector.load %arg2[%c0_22, %c4_23, %c0_24, %c0_25] : memref<1x16x1x128xf32, #tpu.memory_space<vmem>>, vector<1x1x1x128xf32>
    %162 = vector.shape_cast %161 : vector<1x1x1x128xf32> to vector<1x128xf32>
    %cst_26 = arith.constant 0.000000e+00 : f32
    %163 = vector.broadcast %cst_26 : f32 to vector<1x128xf32>
    %164 = arith.maximumf %162, %163 : vector<1x128xf32>
    %c0_27 = arith.constant 0 : index
    %c5_28 = arith.constant 5 : index
    %c0_29 = arith.constant 0 : index
    %c0_30 = arith.constant 0 : index
    %165 = vector.load %arg2[%c0_27, %c5_28, %c0_29, %c0_30] : memref<1x16x1x128xf32, #tpu.memory_space<vmem>>, vector<1x1x1x128xf32>
    %166 = vector.shape_cast %165 : vector<1x1x1x128xf32> to vector<1x128xf32>
    %cst_31 = arith.constant 0.000000e+00 : f32
    %167 = vector.broadcast %cst_31 : f32 to vector<1x128xf32>
    %168 = arith.maximumf %166, %167 : vector<1x128xf32>
    %c0_32 = arith.constant 0 : index
    %c6_33 = arith.constant 6 : index
    %c0_34 = arith.constant 0 : index
    %c0_35 = arith.constant 0 : index
    %169 = vector.load %arg2[%c0_32, %c6_33, %c0_34, %c0_35] : memref<1x16x1x128xf32, #tpu.memory_space<vmem>>, vector<1x1x1x128xf32>
    %170 = vector.shape_cast %169 : vector<1x1x1x128xf32> to vector<1x128xf32>
    %cst_36 = arith.constant 0.000000e+00 : f32
    %171 = vector.broadcast %cst_36 : f32 to vector<1x128xf32>
    %172 = arith.maximumf %170, %171 : vector<1x128xf32>
    %c0_37 = arith.constant 0 : index
    %c7_38 = arith.constant 7 : index
    %c0_39 = arith.constant 0 : index
    %c0_40 = arith.constant 0 : index
    %173 = vector.load %arg2[%c0_37, %c7_38, %c0_39, %c0_40] : memref<1x16x1x128xf32, #tpu.memory_space<vmem>>, vector<1x1x1x128xf32>
    %174 = vector.shape_cast %173 : vector<1x1x1x128xf32> to vector<1x128xf32>
    %cst_41 = arith.constant 0.000000e+00 : f32
    %175 = vector.broadcast %cst_41 : f32 to vector<1x128xf32>
    %176 = arith.maximumf %174, %175 : vector<1x128xf32>
    %177 = arith.addf %164, %168 : vector<1x128xf32>
    %178 = arith.addf %177, %172 : vector<1x128xf32>
    %179 = arith.addf %178, %176 : vector<1x128xf32>
    %cst_42 = arith.constant 2.500000e-01 : f32
    %180 = vector.broadcast %cst_42 : f32 to vector<1x128xf32>
    %181 = arith.mulf %179, %180 : vector<1x128xf32>
    %182 = arith.subf %164, %181 : vector<1x128xf32>
    %183 = arith.subf %168, %181 : vector<1x128xf32>
    %184 = arith.subf %172, %181 : vector<1x128xf32>
    %185 = arith.subf %176, %181 : vector<1x128xf32>
    %186 = arith.mulf %182, %182 : vector<1x128xf32>
    %187 = arith.mulf %183, %183 : vector<1x128xf32>
    %188 = arith.addf %186, %187 : vector<1x128xf32>
    %189 = arith.mulf %184, %184 : vector<1x128xf32>
    %190 = arith.addf %188, %189 : vector<1x128xf32>
    %191 = arith.mulf %185, %185 : vector<1x128xf32>
    %192 = arith.addf %190, %191 : vector<1x128xf32>
    %cst_43 = arith.constant 2.500000e-01 : f32
    %193 = vector.broadcast %cst_43 : f32 to vector<1x128xf32>
    %194 = arith.mulf %192, %193 : vector<1x128xf32>
    %cst_44 = arith.constant 9.99999974E-6 : f32
    %195 = vector.broadcast %cst_44 : f32 to vector<1x128xf32>
    %196 = arith.addf %194, %195 : vector<1x128xf32>
    %197 = math.rsqrt %196 : vector<1x128xf32>
    %198 = arith.mulf %182, %197 : vector<1x128xf32>
    %199 = arith.mulf %183, %197 : vector<1x128xf32>
    %200 = arith.mulf %184, %197 : vector<1x128xf32>
    %201 = arith.mulf %185, %197 : vector<1x128xf32>
    %202 = vector.broadcast %0 : f32 to vector<1x128xf32>
    %203 = arith.mulf %202, %198 : vector<1x128xf32>
    %204 = vector.broadcast %1 : f32 to vector<1x128xf32>
    %205 = arith.mulf %204, %199 : vector<1x128xf32>
    %206 = arith.addf %203, %205 : vector<1x128xf32>
    %207 = vector.broadcast %2 : f32 to vector<1x128xf32>
    %208 = arith.mulf %207, %200 : vector<1x128xf32>
    %209 = arith.addf %206, %208 : vector<1x128xf32>
    %210 = vector.broadcast %3 : f32 to vector<1x128xf32>
    %211 = arith.mulf %210, %201 : vector<1x128xf32>
    %212 = arith.addf %209, %211 : vector<1x128xf32>
    %213 = arith.maximumf %83, %212 : vector<1x128xf32>
    %214 = vector.broadcast %4 : f32 to vector<1x128xf32>
    %215 = arith.mulf %214, %198 : vector<1x128xf32>
    %216 = vector.broadcast %5 : f32 to vector<1x128xf32>
    %217 = arith.mulf %216, %199 : vector<1x128xf32>
    %218 = arith.addf %215, %217 : vector<1x128xf32>
    %219 = vector.broadcast %6 : f32 to vector<1x128xf32>
    %220 = arith.mulf %219, %200 : vector<1x128xf32>
    %221 = arith.addf %218, %220 : vector<1x128xf32>
    %222 = vector.broadcast %7 : f32 to vector<1x128xf32>
    %223 = arith.mulf %222, %201 : vector<1x128xf32>
    %224 = arith.addf %221, %223 : vector<1x128xf32>
    %225 = arith.maximumf %94, %224 : vector<1x128xf32>
    %226 = vector.broadcast %8 : f32 to vector<1x128xf32>
    %227 = arith.mulf %226, %198 : vector<1x128xf32>
    %228 = vector.broadcast %9 : f32 to vector<1x128xf32>
    %229 = arith.mulf %228, %199 : vector<1x128xf32>
    %230 = arith.addf %227, %229 : vector<1x128xf32>
    %231 = vector.broadcast %10 : f32 to vector<1x128xf32>
    %232 = arith.mulf %231, %200 : vector<1x128xf32>
    %233 = arith.addf %230, %232 : vector<1x128xf32>
    %234 = vector.broadcast %11 : f32 to vector<1x128xf32>
    %235 = arith.mulf %234, %201 : vector<1x128xf32>
    %236 = arith.addf %233, %235 : vector<1x128xf32>
    %237 = arith.maximumf %105, %236 : vector<1x128xf32>
    %238 = vector.broadcast %12 : f32 to vector<1x128xf32>
    %239 = arith.mulf %238, %198 : vector<1x128xf32>
    %240 = vector.broadcast %13 : f32 to vector<1x128xf32>
    %241 = arith.mulf %240, %199 : vector<1x128xf32>
    %242 = arith.addf %239, %241 : vector<1x128xf32>
    %243 = vector.broadcast %14 : f32 to vector<1x128xf32>
    %244 = arith.mulf %243, %200 : vector<1x128xf32>
    %245 = arith.addf %242, %244 : vector<1x128xf32>
    %246 = vector.broadcast %15 : f32 to vector<1x128xf32>
    %247 = arith.mulf %246, %201 : vector<1x128xf32>
    %248 = arith.addf %245, %247 : vector<1x128xf32>
    %249 = arith.maximumf %116, %248 : vector<1x128xf32>
    %250 = vector.broadcast %16 : f32 to vector<1x128xf32>
    %251 = arith.mulf %250, %198 : vector<1x128xf32>
    %252 = vector.broadcast %17 : f32 to vector<1x128xf32>
    %253 = arith.mulf %252, %199 : vector<1x128xf32>
    %254 = arith.addf %251, %253 : vector<1x128xf32>
    %255 = vector.broadcast %18 : f32 to vector<1x128xf32>
    %256 = arith.mulf %255, %200 : vector<1x128xf32>
    %257 = arith.addf %254, %256 : vector<1x128xf32>
    %258 = vector.broadcast %19 : f32 to vector<1x128xf32>
    %259 = arith.mulf %258, %201 : vector<1x128xf32>
    %260 = arith.addf %257, %259 : vector<1x128xf32>
    %261 = arith.maximumf %127, %260 : vector<1x128xf32>
    %262 = vector.broadcast %20 : f32 to vector<1x128xf32>
    %263 = arith.mulf %262, %198 : vector<1x128xf32>
    %264 = vector.broadcast %21 : f32 to vector<1x128xf32>
    %265 = arith.mulf %264, %199 : vector<1x128xf32>
    %266 = arith.addf %263, %265 : vector<1x128xf32>
    %267 = vector.broadcast %22 : f32 to vector<1x128xf32>
    %268 = arith.mulf %267, %200 : vector<1x128xf32>
    %269 = arith.addf %266, %268 : vector<1x128xf32>
    %270 = vector.broadcast %23 : f32 to vector<1x128xf32>
    %271 = arith.mulf %270, %201 : vector<1x128xf32>
    %272 = arith.addf %269, %271 : vector<1x128xf32>
    %273 = arith.maximumf %138, %272 : vector<1x128xf32>
    %274 = vector.broadcast %24 : f32 to vector<1x128xf32>
    %275 = arith.mulf %274, %198 : vector<1x128xf32>
    %276 = vector.broadcast %25 : f32 to vector<1x128xf32>
    %277 = arith.mulf %276, %199 : vector<1x128xf32>
    %278 = arith.addf %275, %277 : vector<1x128xf32>
    %279 = vector.broadcast %26 : f32 to vector<1x128xf32>
    %280 = arith.mulf %279, %200 : vector<1x128xf32>
    %281 = arith.addf %278, %280 : vector<1x128xf32>
    %282 = vector.broadcast %27 : f32 to vector<1x128xf32>
    %283 = arith.mulf %282, %201 : vector<1x128xf32>
    %284 = arith.addf %281, %283 : vector<1x128xf32>
    %285 = arith.maximumf %149, %284 : vector<1x128xf32>
    %286 = vector.broadcast %28 : f32 to vector<1x128xf32>
    %287 = arith.mulf %286, %198 : vector<1x128xf32>
    %288 = vector.broadcast %29 : f32 to vector<1x128xf32>
    %289 = arith.mulf %288, %199 : vector<1x128xf32>
    %290 = arith.addf %287, %289 : vector<1x128xf32>
    %291 = vector.broadcast %30 : f32 to vector<1x128xf32>
    %292 = arith.mulf %291, %200 : vector<1x128xf32>
    %293 = arith.addf %290, %292 : vector<1x128xf32>
    %294 = vector.broadcast %31 : f32 to vector<1x128xf32>
    %295 = arith.mulf %294, %201 : vector<1x128xf32>
    %296 = arith.addf %293, %295 : vector<1x128xf32>
    %297 = arith.maximumf %160, %296 : vector<1x128xf32>
    %c0_45 = arith.constant 0 : index
    %c8_46 = arith.constant 8 : index
    %c0_47 = arith.constant 0 : index
    %c0_48 = arith.constant 0 : index
    %298 = vector.load %arg2[%c0_45, %c8_46, %c0_47, %c0_48] : memref<1x16x1x128xf32, #tpu.memory_space<vmem>>, vector<1x1x1x128xf32>
    %299 = vector.shape_cast %298 : vector<1x1x1x128xf32> to vector<1x128xf32>
    %cst_49 = arith.constant 0.000000e+00 : f32
    %300 = vector.broadcast %cst_49 : f32 to vector<1x128xf32>
    %301 = arith.maximumf %299, %300 : vector<1x128xf32>
    %c0_50 = arith.constant 0 : index
    %c9_51 = arith.constant 9 : index
    %c0_52 = arith.constant 0 : index
    %c0_53 = arith.constant 0 : index
    %302 = vector.load %arg2[%c0_50, %c9_51, %c0_52, %c0_53] : memref<1x16x1x128xf32, #tpu.memory_space<vmem>>, vector<1x1x1x128xf32>
    %303 = vector.shape_cast %302 : vector<1x1x1x128xf32> to vector<1x128xf32>
    %cst_54 = arith.constant 0.000000e+00 : f32
    %304 = vector.broadcast %cst_54 : f32 to vector<1x128xf32>
    %305 = arith.maximumf %303, %304 : vector<1x128xf32>
    %c0_55 = arith.constant 0 : index
    %c10_56 = arith.constant 10 : index
    %c0_57 = arith.constant 0 : index
    %c0_58 = arith.constant 0 : index
    %306 = vector.load %arg2[%c0_55, %c10_56, %c0_57, %c0_58] : memref<1x16x1x128xf32, #tpu.memory_space<vmem>>, vector<1x1x1x128xf32>
    %307 = vector.shape_cast %306 : vector<1x1x1x128xf32> to vector<1x128xf32>
    %cst_59 = arith.constant 0.000000e+00 : f32
    %308 = vector.broadcast %cst_59 : f32 to vector<1x128xf32>
    %309 = arith.maximumf %307, %308 : vector<1x128xf32>
    %c0_60 = arith.constant 0 : index
    %c11_61 = arith.constant 11 : index
    %c0_62 = arith.constant 0 : index
    %c0_63 = arith.constant 0 : index
    %310 = vector.load %arg2[%c0_60, %c11_61, %c0_62, %c0_63] : memref<1x16x1x128xf32, #tpu.memory_space<vmem>>, vector<1x1x1x128xf32>
    %311 = vector.shape_cast %310 : vector<1x1x1x128xf32> to vector<1x128xf32>
    %cst_64 = arith.constant 0.000000e+00 : f32
    %312 = vector.broadcast %cst_64 : f32 to vector<1x128xf32>
    %313 = arith.maximumf %311, %312 : vector<1x128xf32>
    %314 = arith.addf %301, %305 : vector<1x128xf32>
    %315 = arith.addf %314, %309 : vector<1x128xf32>
    %316 = arith.addf %315, %313 : vector<1x128xf32>
    %cst_65 = arith.constant 2.500000e-01 : f32
    %317 = vector.broadcast %cst_65 : f32 to vector<1x128xf32>
    %318 = arith.mulf %316, %317 : vector<1x128xf32>
    %319 = arith.subf %301, %318 : vector<1x128xf32>
    %320 = arith.subf %305, %318 : vector<1x128xf32>
    %321 = arith.subf %309, %318 : vector<1x128xf32>
    %322 = arith.subf %313, %318 : vector<1x128xf32>
    %323 = arith.mulf %319, %319 : vector<1x128xf32>
    %324 = arith.mulf %320, %320 : vector<1x128xf32>
    %325 = arith.addf %323, %324 : vector<1x128xf32>
    %326 = arith.mulf %321, %321 : vector<1x128xf32>
    %327 = arith.addf %325, %326 : vector<1x128xf32>
    %328 = arith.mulf %322, %322 : vector<1x128xf32>
    %329 = arith.addf %327, %328 : vector<1x128xf32>
    %cst_66 = arith.constant 2.500000e-01 : f32
    %330 = vector.broadcast %cst_66 : f32 to vector<1x128xf32>
    %331 = arith.mulf %329, %330 : vector<1x128xf32>
    %cst_67 = arith.constant 9.99999974E-6 : f32
    %332 = vector.broadcast %cst_67 : f32 to vector<1x128xf32>
    %333 = arith.addf %331, %332 : vector<1x128xf32>
    %334 = math.rsqrt %333 : vector<1x128xf32>
    %335 = arith.mulf %319, %334 : vector<1x128xf32>
    %336 = arith.mulf %320, %334 : vector<1x128xf32>
    %337 = arith.mulf %321, %334 : vector<1x128xf32>
    %338 = arith.mulf %322, %334 : vector<1x128xf32>
    %339 = vector.broadcast %0 : f32 to vector<1x128xf32>
    %340 = arith.mulf %339, %335 : vector<1x128xf32>
    %341 = vector.broadcast %1 : f32 to vector<1x128xf32>
    %342 = arith.mulf %341, %336 : vector<1x128xf32>
    %343 = arith.addf %340, %342 : vector<1x128xf32>
    %344 = vector.broadcast %2 : f32 to vector<1x128xf32>
    %345 = arith.mulf %344, %337 : vector<1x128xf32>
    %346 = arith.addf %343, %345 : vector<1x128xf32>
    %347 = vector.broadcast %3 : f32 to vector<1x128xf32>
    %348 = arith.mulf %347, %338 : vector<1x128xf32>
    %349 = arith.addf %346, %348 : vector<1x128xf32>
    %350 = arith.maximumf %213, %349 : vector<1x128xf32>
    %351 = vector.broadcast %4 : f32 to vector<1x128xf32>
    %352 = arith.mulf %351, %335 : vector<1x128xf32>
    %353 = vector.broadcast %5 : f32 to vector<1x128xf32>
    %354 = arith.mulf %353, %336 : vector<1x128xf32>
    %355 = arith.addf %352, %354 : vector<1x128xf32>
    %356 = vector.broadcast %6 : f32 to vector<1x128xf32>
    %357 = arith.mulf %356, %337 : vector<1x128xf32>
    %358 = arith.addf %355, %357 : vector<1x128xf32>
    %359 = vector.broadcast %7 : f32 to vector<1x128xf32>
    %360 = arith.mulf %359, %338 : vector<1x128xf32>
    %361 = arith.addf %358, %360 : vector<1x128xf32>
    %362 = arith.maximumf %225, %361 : vector<1x128xf32>
    %363 = vector.broadcast %8 : f32 to vector<1x128xf32>
    %364 = arith.mulf %363, %335 : vector<1x128xf32>
    %365 = vector.broadcast %9 : f32 to vector<1x128xf32>
    %366 = arith.mulf %365, %336 : vector<1x128xf32>
    %367 = arith.addf %364, %366 : vector<1x128xf32>
    %368 = vector.broadcast %10 : f32 to vector<1x128xf32>
    %369 = arith.mulf %368, %337 : vector<1x128xf32>
    %370 = arith.addf %367, %369 : vector<1x128xf32>
    %371 = vector.broadcast %11 : f32 to vector<1x128xf32>
    %372 = arith.mulf %371, %338 : vector<1x128xf32>
    %373 = arith.addf %370, %372 : vector<1x128xf32>
    %374 = arith.maximumf %237, %373 : vector<1x128xf32>
    %375 = vector.broadcast %12 : f32 to vector<1x128xf32>
    %376 = arith.mulf %375, %335 : vector<1x128xf32>
    %377 = vector.broadcast %13 : f32 to vector<1x128xf32>
    %378 = arith.mulf %377, %336 : vector<1x128xf32>
    %379 = arith.addf %376, %378 : vector<1x128xf32>
    %380 = vector.broadcast %14 : f32 to vector<1x128xf32>
    %381 = arith.mulf %380, %337 : vector<1x128xf32>
    %382 = arith.addf %379, %381 : vector<1x128xf32>
    %383 = vector.broadcast %15 : f32 to vector<1x128xf32>
    %384 = arith.mulf %383, %338 : vector<1x128xf32>
    %385 = arith.addf %382, %384 : vector<1x128xf32>
    %386 = arith.maximumf %249, %385 : vector<1x128xf32>
    %387 = vector.broadcast %16 : f32 to vector<1x128xf32>
    %388 = arith.mulf %387, %335 : vector<1x128xf32>
    %389 = vector.broadcast %17 : f32 to vector<1x128xf32>
    %390 = arith.mulf %389, %336 : vector<1x128xf32>
    %391 = arith.addf %388, %390 : vector<1x128xf32>
    %392 = vector.broadcast %18 : f32 to vector<1x128xf32>
    %393 = arith.mulf %392, %337 : vector<1x128xf32>
    %394 = arith.addf %391, %393 : vector<1x128xf32>
    %395 = vector.broadcast %19 : f32 to vector<1x128xf32>
    %396 = arith.mulf %395, %338 : vector<1x128xf32>
    %397 = arith.addf %394, %396 : vector<1x128xf32>
    %398 = arith.maximumf %261, %397 : vector<1x128xf32>
    %399 = vector.broadcast %20 : f32 to vector<1x128xf32>
    %400 = arith.mulf %399, %335 : vector<1x128xf32>
    %401 = vector.broadcast %21 : f32 to vector<1x128xf32>
    %402 = arith.mulf %401, %336 : vector<1x128xf32>
    %403 = arith.addf %400, %402 : vector<1x128xf32>
    %404 = vector.broadcast %22 : f32 to vector<1x128xf32>
    %405 = arith.mulf %404, %337 : vector<1x128xf32>
    %406 = arith.addf %403, %405 : vector<1x128xf32>
    %407 = vector.broadcast %23 : f32 to vector<1x128xf32>
    %408 = arith.mulf %407, %338 : vector<1x128xf32>
    %409 = arith.addf %406, %408 : vector<1x128xf32>
    %410 = arith.maximumf %273, %409 : vector<1x128xf32>
    %411 = vector.broadcast %24 : f32 to vector<1x128xf32>
    %412 = arith.mulf %411, %335 : vector<1x128xf32>
    %413 = vector.broadcast %25 : f32 to vector<1x128xf32>
    %414 = arith.mulf %413, %336 : vector<1x128xf32>
    %415 = arith.addf %412, %414 : vector<1x128xf32>
    %416 = vector.broadcast %26 : f32 to vector<1x128xf32>
    %417 = arith.mulf %416, %337 : vector<1x128xf32>
    %418 = arith.addf %415, %417 : vector<1x128xf32>
    %419 = vector.broadcast %27 : f32 to vector<1x128xf32>
    %420 = arith.mulf %419, %338 : vector<1x128xf32>
    %421 = arith.addf %418, %420 : vector<1x128xf32>
    %422 = arith.maximumf %285, %421 : vector<1x128xf32>
    %423 = vector.broadcast %28 : f32 to vector<1x128xf32>
    %424 = arith.mulf %423, %335 : vector<1x128xf32>
    %425 = vector.broadcast %29 : f32 to vector<1x128xf32>
    %426 = arith.mulf %425, %336 : vector<1x128xf32>
    %427 = arith.addf %424, %426 : vector<1x128xf32>
    %428 = vector.broadcast %30 : f32 to vector<1x128xf32>
    %429 = arith.mulf %428, %337 : vector<1x128xf32>
    %430 = arith.addf %427, %429 : vector<1x128xf32>
    %431 = vector.broadcast %31 : f32 to vector<1x128xf32>
    %432 = arith.mulf %431, %338 : vector<1x128xf32>
    %433 = arith.addf %430, %432 : vector<1x128xf32>
    %434 = arith.maximumf %297, %433 : vector<1x128xf32>
    %c0_68 = arith.constant 0 : index
    %c12_69 = arith.constant 12 : index
    %c0_70 = arith.constant 0 : index
    %c0_71 = arith.constant 0 : index
    %435 = vector.load %arg2[%c0_68, %c12_69, %c0_70, %c0_71] : memref<1x16x1x128xf32, #tpu.memory_space<vmem>>, vector<1x1x1x128xf32>
    %436 = vector.shape_cast %435 : vector<1x1x1x128xf32> to vector<1x128xf32>
    %cst_72 = arith.constant 0.000000e+00 : f32
    %437 = vector.broadcast %cst_72 : f32 to vector<1x128xf32>
    %438 = arith.maximumf %436, %437 : vector<1x128xf32>
    %c0_73 = arith.constant 0 : index
    %c13_74 = arith.constant 13 : index
    %c0_75 = arith.constant 0 : index
    %c0_76 = arith.constant 0 : index
    %439 = vector.load %arg2[%c0_73, %c13_74, %c0_75, %c0_76] : memref<1x16x1x128xf32, #tpu.memory_space<vmem>>, vector<1x1x1x128xf32>
    %440 = vector.shape_cast %439 : vector<1x1x1x128xf32> to vector<1x128xf32>
    %cst_77 = arith.constant 0.000000e+00 : f32
    %441 = vector.broadcast %cst_77 : f32 to vector<1x128xf32>
    %442 = arith.maximumf %440, %441 : vector<1x128xf32>
    %c0_78 = arith.constant 0 : index
    %c14_79 = arith.constant 14 : index
    %c0_80 = arith.constant 0 : index
    %c0_81 = arith.constant 0 : index
    %443 = vector.load %arg2[%c0_78, %c14_79, %c0_80, %c0_81] : memref<1x16x1x128xf32, #tpu.memory_space<vmem>>, vector<1x1x1x128xf32>
    %444 = vector.shape_cast %443 : vector<1x1x1x128xf32> to vector<1x128xf32>
    %cst_82 = arith.constant 0.000000e+00 : f32
    %445 = vector.broadcast %cst_82 : f32 to vector<1x128xf32>
    %446 = arith.maximumf %444, %445 : vector<1x128xf32>
    %c0_83 = arith.constant 0 : index
    %c15_84 = arith.constant 15 : index
    %c0_85 = arith.constant 0 : index
    %c0_86 = arith.constant 0 : index
    %447 = vector.load %arg2[%c0_83, %c15_84, %c0_85, %c0_86] : memref<1x16x1x128xf32, #tpu.memory_space<vmem>>, vector<1x1x1x128xf32>
    %448 = vector.shape_cast %447 : vector<1x1x1x128xf32> to vector<1x128xf32>
    %cst_87 = arith.constant 0.000000e+00 : f32
    %449 = vector.broadcast %cst_87 : f32 to vector<1x128xf32>
    %450 = arith.maximumf %448, %449 : vector<1x128xf32>
    %451 = arith.addf %438, %442 : vector<1x128xf32>
    %452 = arith.addf %451, %446 : vector<1x128xf32>
    %453 = arith.addf %452, %450 : vector<1x128xf32>
    %cst_88 = arith.constant 2.500000e-01 : f32
    %454 = vector.broadcast %cst_88 : f32 to vector<1x128xf32>
    %455 = arith.mulf %453, %454 : vector<1x128xf32>
    %456 = arith.subf %438, %455 : vector<1x128xf32>
    %457 = arith.subf %442, %455 : vector<1x128xf32>
    %458 = arith.subf %446, %455 : vector<1x128xf32>
    %459 = arith.subf %450, %455 : vector<1x128xf32>
    %460 = arith.mulf %456, %456 : vector<1x128xf32>
    %461 = arith.mulf %457, %457 : vector<1x128xf32>
    %462 = arith.addf %460, %461 : vector<1x128xf32>
    %463 = arith.mulf %458, %458 : vector<1x128xf32>
    %464 = arith.addf %462, %463 : vector<1x128xf32>
    %465 = arith.mulf %459, %459 : vector<1x128xf32>
    %466 = arith.addf %464, %465 : vector<1x128xf32>
    %cst_89 = arith.constant 2.500000e-01 : f32
    %467 = vector.broadcast %cst_89 : f32 to vector<1x128xf32>
    %468 = arith.mulf %466, %467 : vector<1x128xf32>
    %cst_90 = arith.constant 9.99999974E-6 : f32
    %469 = vector.broadcast %cst_90 : f32 to vector<1x128xf32>
    %470 = arith.addf %468, %469 : vector<1x128xf32>
    %471 = math.rsqrt %470 : vector<1x128xf32>
    %472 = arith.mulf %456, %471 : vector<1x128xf32>
    %473 = arith.mulf %457, %471 : vector<1x128xf32>
    %474 = arith.mulf %458, %471 : vector<1x128xf32>
    %475 = arith.mulf %459, %471 : vector<1x128xf32>
    %476 = vector.broadcast %0 : f32 to vector<1x128xf32>
    %477 = arith.mulf %476, %472 : vector<1x128xf32>
    %478 = vector.broadcast %1 : f32 to vector<1x128xf32>
    %479 = arith.mulf %478, %473 : vector<1x128xf32>
    %480 = arith.addf %477, %479 : vector<1x128xf32>
    %481 = vector.broadcast %2 : f32 to vector<1x128xf32>
    %482 = arith.mulf %481, %474 : vector<1x128xf32>
    %483 = arith.addf %480, %482 : vector<1x128xf32>
    %484 = vector.broadcast %3 : f32 to vector<1x128xf32>
    %485 = arith.mulf %484, %475 : vector<1x128xf32>
    %486 = arith.addf %483, %485 : vector<1x128xf32>
    %487 = arith.maximumf %350, %486 : vector<1x128xf32>
    %488 = vector.broadcast %4 : f32 to vector<1x128xf32>
    %489 = arith.mulf %488, %472 : vector<1x128xf32>
    %490 = vector.broadcast %5 : f32 to vector<1x128xf32>
    %491 = arith.mulf %490, %473 : vector<1x128xf32>
    %492 = arith.addf %489, %491 : vector<1x128xf32>
    %493 = vector.broadcast %6 : f32 to vector<1x128xf32>
    %494 = arith.mulf %493, %474 : vector<1x128xf32>
    %495 = arith.addf %492, %494 : vector<1x128xf32>
    %496 = vector.broadcast %7 : f32 to vector<1x128xf32>
    %497 = arith.mulf %496, %475 : vector<1x128xf32>
    %498 = arith.addf %495, %497 : vector<1x128xf32>
    %499 = arith.maximumf %362, %498 : vector<1x128xf32>
    %500 = vector.broadcast %8 : f32 to vector<1x128xf32>
    %501 = arith.mulf %500, %472 : vector<1x128xf32>
    %502 = vector.broadcast %9 : f32 to vector<1x128xf32>
    %503 = arith.mulf %502, %473 : vector<1x128xf32>
    %504 = arith.addf %501, %503 : vector<1x128xf32>
    %505 = vector.broadcast %10 : f32 to vector<1x128xf32>
    %506 = arith.mulf %505, %474 : vector<1x128xf32>
    %507 = arith.addf %504, %506 : vector<1x128xf32>
    %508 = vector.broadcast %11 : f32 to vector<1x128xf32>
    %509 = arith.mulf %508, %475 : vector<1x128xf32>
    %510 = arith.addf %507, %509 : vector<1x128xf32>
    %511 = arith.maximumf %374, %510 : vector<1x128xf32>
    %512 = vector.broadcast %12 : f32 to vector<1x128xf32>
    %513 = arith.mulf %512, %472 : vector<1x128xf32>
    %514 = vector.broadcast %13 : f32 to vector<1x128xf32>
    %515 = arith.mulf %514, %473 : vector<1x128xf32>
    %516 = arith.addf %513, %515 : vector<1x128xf32>
    %517 = vector.broadcast %14 : f32 to vector<1x128xf32>
    %518 = arith.mulf %517, %474 : vector<1x128xf32>
    %519 = arith.addf %516, %518 : vector<1x128xf32>
    %520 = vector.broadcast %15 : f32 to vector<1x128xf32>
    %521 = arith.mulf %520, %475 : vector<1x128xf32>
    %522 = arith.addf %519, %521 : vector<1x128xf32>
    %523 = arith.maximumf %386, %522 : vector<1x128xf32>
    %524 = vector.broadcast %16 : f32 to vector<1x128xf32>
    %525 = arith.mulf %524, %472 : vector<1x128xf32>
    %526 = vector.broadcast %17 : f32 to vector<1x128xf32>
    %527 = arith.mulf %526, %473 : vector<1x128xf32>
    %528 = arith.addf %525, %527 : vector<1x128xf32>
    %529 = vector.broadcast %18 : f32 to vector<1x128xf32>
    %530 = arith.mulf %529, %474 : vector<1x128xf32>
    %531 = arith.addf %528, %530 : vector<1x128xf32>
    %532 = vector.broadcast %19 : f32 to vector<1x128xf32>
    %533 = arith.mulf %532, %475 : vector<1x128xf32>
    %534 = arith.addf %531, %533 : vector<1x128xf32>
    %535 = arith.maximumf %398, %534 : vector<1x128xf32>
    %536 = vector.broadcast %20 : f32 to vector<1x128xf32>
    %537 = arith.mulf %536, %472 : vector<1x128xf32>
    %538 = vector.broadcast %21 : f32 to vector<1x128xf32>
    %539 = arith.mulf %538, %473 : vector<1x128xf32>
    %540 = arith.addf %537, %539 : vector<1x128xf32>
    %541 = vector.broadcast %22 : f32 to vector<1x128xf32>
    %542 = arith.mulf %541, %474 : vector<1x128xf32>
    %543 = arith.addf %540, %542 : vector<1x128xf32>
    %544 = vector.broadcast %23 : f32 to vector<1x128xf32>
    %545 = arith.mulf %544, %475 : vector<1x128xf32>
    %546 = arith.addf %543, %545 : vector<1x128xf32>
    %547 = arith.maximumf %410, %546 : vector<1x128xf32>
    %548 = vector.broadcast %24 : f32 to vector<1x128xf32>
    %549 = arith.mulf %548, %472 : vector<1x128xf32>
    %550 = vector.broadcast %25 : f32 to vector<1x128xf32>
    %551 = arith.mulf %550, %473 : vector<1x128xf32>
    %552 = arith.addf %549, %551 : vector<1x128xf32>
    %553 = vector.broadcast %26 : f32 to vector<1x128xf32>
    %554 = arith.mulf %553, %474 : vector<1x128xf32>
    %555 = arith.addf %552, %554 : vector<1x128xf32>
    %556 = vector.broadcast %27 : f32 to vector<1x128xf32>
    %557 = arith.mulf %556, %475 : vector<1x128xf32>
    %558 = arith.addf %555, %557 : vector<1x128xf32>
    %559 = arith.maximumf %422, %558 : vector<1x128xf32>
    %560 = vector.broadcast %28 : f32 to vector<1x128xf32>
    %561 = arith.mulf %560, %472 : vector<1x128xf32>
    %562 = vector.broadcast %29 : f32 to vector<1x128xf32>
    %563 = arith.mulf %562, %473 : vector<1x128xf32>
    %564 = arith.addf %561, %563 : vector<1x128xf32>
    %565 = vector.broadcast %30 : f32 to vector<1x128xf32>
    %566 = arith.mulf %565, %474 : vector<1x128xf32>
    %567 = arith.addf %564, %566 : vector<1x128xf32>
    %568 = vector.broadcast %31 : f32 to vector<1x128xf32>
    %569 = arith.mulf %568, %475 : vector<1x128xf32>
    %570 = arith.addf %567, %569 : vector<1x128xf32>
    %571 = arith.maximumf %434, %570 : vector<1x128xf32>
    %c0_91 = arith.constant 0 : index
    %572 = memref.load %arg4[%c0_91] : memref<8xf32, #tpu.memory_space<smem>>
    %573 = vector.broadcast %572 : f32 to vector<1x128xf32>
    %574 = arith.addf %487, %573 : vector<1x128xf32>
    %c0_92 = arith.constant 0 : index
    %c0_93 = arith.constant 0 : index
    %c0_94 = arith.constant 0 : index
    %c0_95 = arith.constant 0 : index
    %575 = vector.load %arg5[%c0_92, %c0_93, %c0_94, %c0_95] : memref<1x8x1x128xf32, #tpu.memory_space<vmem>>, vector<1x1x1x128xf32>
    %576 = vector.shape_cast %575 : vector<1x1x1x128xf32> to vector<1x128xf32>
    %577 = vector.shape_cast %574 : vector<1x128xf32> to vector<1x1x1x128xf32>
    tpu.vector_store %arg5[%c0_92, %c0_93, %c0_94, %c0_95], %577 {strides = array<i32>} : memref<1x8x1x128xf32, #tpu.memory_space<vmem>>, vector<1x1x1x128xf32>,
    %c1_96 = arith.constant 1 : index
    %578 = memref.load %arg4[%c1_96] : memref<8xf32, #tpu.memory_space<smem>>
    %579 = vector.broadcast %578 : f32 to vector<1x128xf32>
    %580 = arith.addf %499, %579 : vector<1x128xf32>
    %c0_97 = arith.constant 0 : index
    %c1_98 = arith.constant 1 : index
    %c0_99 = arith.constant 0 : index
    %c0_100 = arith.constant 0 : index
    %581 = vector.load %arg5[%c0_97, %c1_98, %c0_99, %c0_100] : memref<1x8x1x128xf32, #tpu.memory_space<vmem>>, vector<1x1x1x128xf32>
    %582 = vector.shape_cast %581 : vector<1x1x1x128xf32> to vector<1x128xf32>
    %583 = vector.shape_cast %580 : vector<1x128xf32> to vector<1x1x1x128xf32>
    tpu.vector_store %arg5[%c0_97, %c1_98, %c0_99, %c0_100], %583 {strides = array<i32>} : memref<1x8x1x128xf32, #tpu.memory_space<vmem>>, vector<1x1x1x128xf32>,
    %c2_101 = arith.constant 2 : index
    %584 = memref.load %arg4[%c2_101] : memref<8xf32, #tpu.memory_space<smem>>
    %585 = vector.broadcast %584 : f32 to vector<1x128xf32>
    %586 = arith.addf %511, %585 : vector<1x128xf32>
    %c0_102 = arith.constant 0 : index
    %c2_103 = arith.constant 2 : index
    %c0_104 = arith.constant 0 : index
    %c0_105 = arith.constant 0 : index
    %587 = vector.load %arg5[%c0_102, %c2_103, %c0_104, %c0_105] : memref<1x8x1x128xf32, #tpu.memory_space<vmem>>, vector<1x1x1x128xf32>
    %588 = vector.shape_cast %587 : vector<1x1x1x128xf32> to vector<1x128xf32>
    %589 = vector.shape_cast %586 : vector<1x128xf32> to vector<1x1x1x128xf32>
    tpu.vector_store %arg5[%c0_102, %c2_103, %c0_104, %c0_105], %589 {strides = array<i32>} : memref<1x8x1x128xf32, #tpu.memory_space<vmem>>, vector<1x1x1x128xf32>,
    %c3_106 = arith.constant 3 : index
    %590 = memref.load %arg4[%c3_106] : memref<8xf32, #tpu.memory_space<smem>>
    %591 = vector.broadcast %590 : f32 to vector<1x128xf32>
    %592 = arith.addf %523, %591 : vector<1x128xf32>
    %c0_107 = arith.constant 0 : index
    %c3_108 = arith.constant 3 : index
    %c0_109 = arith.constant 0 : index
    %c0_110 = arith.constant 0 : index
    %593 = vector.load %arg5[%c0_107, %c3_108, %c0_109, %c0_110] : memref<1x8x1x128xf32, #tpu.memory_space<vmem>>, vector<1x1x1x128xf32>
    %594 = vector.shape_cast %593 : vector<1x1x1x128xf32> to vector<1x128xf32>
    %595 = vector.shape_cast %592 : vector<1x128xf32> to vector<1x1x1x128xf32>
    tpu.vector_store %arg5[%c0_107, %c3_108, %c0_109, %c0_110], %595 {strides = array<i32>} : memref<1x8x1x128xf32, #tpu.memory_space<vmem>>, vector<1x1x1x128xf32>,
    %c4_111 = arith.constant 4 : index
    %596 = memref.load %arg4[%c4_111] : memref<8xf32, #tpu.memory_space<smem>>
    %597 = vector.broadcast %596 : f32 to vector<1x128xf32>
    %598 = arith.addf %535, %597 : vector<1x128xf32>
    %c0_112 = arith.constant 0 : index
    %c4_113 = arith.constant 4 : index
    %c0_114 = arith.constant 0 : index
    %c0_115 = arith.constant 0 : index
    %599 = vector.load %arg5[%c0_112, %c4_113, %c0_114, %c0_115] : memref<1x8x1x128xf32, #tpu.memory_space<vmem>>, vector<1x1x1x128xf32>
    %600 = vector.shape_cast %599 : vector<1x1x1x128xf32> to vector<1x128xf32>
    %601 = vector.shape_cast %598 : vector<1x128xf32> to vector<1x1x1x128xf32>
    tpu.vector_store %arg5[%c0_112, %c4_113, %c0_114, %c0_115], %601 {strides = array<i32>} : memref<1x8x1x128xf32, #tpu.memory_space<vmem>>, vector<1x1x1x128xf32>,
    %c5_116 = arith.constant 5 : index
    %602 = memref.load %arg4[%c5_116] : memref<8xf32, #tpu.memory_space<smem>>
    %603 = vector.broadcast %602 : f32 to vector<1x128xf32>
    %604 = arith.addf %547, %603 : vector<1x128xf32>
    %c0_117 = arith.constant 0 : index
    %c5_118 = arith.constant 5 : index
    %c0_119 = arith.constant 0 : index
    %c0_120 = arith.constant 0 : index
    %605 = vector.load %arg5[%c0_117, %c5_118, %c0_119, %c0_120] : memref<1x8x1x128xf32, #tpu.memory_space<vmem>>, vector<1x1x1x128xf32>
    %606 = vector.shape_cast %605 : vector<1x1x1x128xf32> to vector<1x128xf32>
    %607 = vector.shape_cast %604 : vector<1x128xf32> to vector<1x1x1x128xf32>
    tpu.vector_store %arg5[%c0_117, %c5_118, %c0_119, %c0_120], %607 {strides = array<i32>} : memref<1x8x1x128xf32, #tpu.memory_space<vmem>>, vector<1x1x1x128xf32>,
    %c6_121 = arith.constant 6 : index
    %608 = memref.load %arg4[%c6_121] : memref<8xf32, #tpu.memory_space<smem>>
    %609 = vector.broadcast %608 : f32 to vector<1x128xf32>
    %610 = arith.addf %559, %609 : vector<1x128xf32>
    %c0_122 = arith.constant 0 : index
    %c6_123 = arith.constant 6 : index
    %c0_124 = arith.constant 0 : index
    %c0_125 = arith.constant 0 : index
    %611 = vector.load %arg5[%c0_122, %c6_123, %c0_124, %c0_125] : memref<1x8x1x128xf32, #tpu.memory_space<vmem>>, vector<1x1x1x128xf32>
    %612 = vector.shape_cast %611 : vector<1x1x1x128xf32> to vector<1x128xf32>
    %613 = vector.shape_cast %610 : vector<1x128xf32> to vector<1x1x1x128xf32>
    tpu.vector_store %arg5[%c0_122, %c6_123, %c0_124, %c0_125], %613 {strides = array<i32>} : memref<1x8x1x128xf32, #tpu.memory_space<vmem>>, vector<1x1x1x128xf32>,
    %c7_126 = arith.constant 7 : index
    %614 = memref.load %arg4[%c7_126] : memref<8xf32, #tpu.memory_space<smem>>
    %615 = vector.broadcast %614 : f32 to vector<1x128xf32>
    %616 = arith.addf %571, %615 : vector<1x128xf32>
    %c0_127 = arith.constant 0 : index
    %c7_128 = arith.constant 7 : index
    %c0_129 = arith.constant 0 : index
    %c0_130 = arith.constant 0 : index
    %617 = vector.load %arg5[%c0_127, %c7_128, %c0_129, %c0_130] : memref<1x8x1x128xf32, #tpu.memory_space<vmem>>, vector<1x1x1x128xf32>
    %618 = vector.shape_cast %617 : vector<1x1x1x128xf32> to vector<1x128xf32>
    %619 = vector.shape_cast %616 : vector<1x128xf32> to vector<1x1x1x128xf32>
    tpu.vector_store %arg5[%c0_127, %c7_128, %c0_129, %c0_130], %619 {strides = array<i32>} : memref<1x8x1x128xf32, #tpu.memory_space<vmem>>, vector<1x1x1x128xf32>,
    return
  }
  func.func @transform_0(%arg0: i32, %arg1: i32) -> (i32, i32, i32, i32) {
    %c0_i32 = arith.constant 0 : i32
    %c0_i32_0 = arith.constant 0 : i32
    %c0_i32_1 = arith.constant 0 : i32
    return %arg0, %c0_i32, %arg1, %c0_i32_0 : i32, i32, i32, i32
  }
  func.func @transform_1(%arg0: i32, %arg1: i32) -> i32 {
    %c0_i32 = arith.constant 0 : i32
    %c0_i32_0 = arith.constant 0 : i32
    return %c0_i32 : i32
  }
  func.func @transform_2(%arg0: i32, %arg1: i32) -> i32 {
    %c0_i32 = arith.constant 0 : i32
    %c0_i32_0 = arith.constant 0 : i32
    return %c0_i32 : i32
  }
  func.func @transform_3(%arg0: i32, %arg1: i32) -> (i32, i32, i32, i32) {
    %c0_i32 = arith.constant 0 : i32
    %c0_i32_0 = arith.constant 0 : i32
    %c0_i32_1 = arith.constant 0 : i32
    return %arg0, %c0_i32, %arg1, %c0_i32_0 : i32, i32, i32, i32
  }
}

</mosaic_0001>

<llo_original>
// kernel: trans_block_kn1x1.1
$region0: #{trans_block_kn1x1.1}
  #allocation0 [shape = 'u32[]', space=smem, size = 0x4, offset = 0x4, fixed_abs, tag = 'smem constant byte address 0x4 - core index']
  #allocation1 [shape = 'u32[144,128]{1,0:T(1,128)}', space=vmem, size = 0x12000, scoped, tag = 'internal scratch']
  %s0 = inlined_call_operand.vmem [shape: f32[2,16,1,128], index: 0, kind: input, shape index: {}]
  %s1 = inlined_call_operand.vmem [shape: f32[32], index: 1, kind: input, shape index: {}]
  %s2 = inlined_call_operand.vmem [shape: f32[8], index: 2, kind: input, shape index: {}]
  %s3 = inlined_call_operand.vmem [shape: f32[2,8,1,128], index: 3, kind: output, shape index: {}]
  %s4 = sld [smem:[#allocation0]]
  $region53: #{trans_block_kn1x1.1} parent=0
    _
  %s6 = ssub.s32 1, %s4
  %s7 = scalar_select 0, %s6, %s4
  $region1: #{trans_block_kn1x1.1} parent=0
    #allocation2 [shape = 'u8[512]{0}', space=smem, size = 0x200, scoped, tag = 'input window, operand 1, single buffered']
    #allocation3 [shape = 's32[2]{0}', space=sflag, size = 0x8, scoped, tag = 'scoped memory for trans_block_kn1x1.1']
    #allocation4 [shape = 'u8[512]{0}', space=smem, size = 0x200, scoped, tag = 'input window, operand 2, single buffered']
    #allocation5 [shape = 's32[1]{0}', space=sflag, size = 0x4, scoped, tag = 'scoped memory for trans_block_kn1x1.1']
    %8 = vsyncpa [#allocation3], 0
    %9 = vsyncpa [#allocation5], 0
    loop: start=0, step=1, limit=4
    $region2: #{trans_block_kn1x1.1} parent=1 // loop_pre_header
      _
    $region3: #{trans_block_kn1x1.1} parent=1 // loop_header
      %s11 = sphi 0, %s15
      %p12 = scmp.ge.s32.totalorder %s11, 4
      %s18 = sphi 0, %s30
      %s19 = sphi 0, %s26
      %s20 = sphi 0, %s18
      %s21 = sphi 0, %s19
      %s22 = sphi 0, %s20
      %s23 = sphi 0, %s21
      %s35 = sphi 0, %s37
      %s38 = sphi 0, %s35
      %s39 = sphi 0, %s38
      %s55 = sphi 0, %s39
      %s59 = sphi 0, %s59
      %s61 = sphi 0, %s59
      %s62 = sphi 0, %s61
      %s76 = sphi 0, %s62
      %s80 = sphi 0, %s80
      %s82 = sphi 0, %s80
      %s83 = sphi 0, %s82
      %s97 = sphi 0, %s83
      %s105 = sphi 0, %s107
      %s108 = sphi 0, %s105
      %s109 = sphi 0, %s108
      %s125 = sphi 0, %s109
    $region4: #{trans_block_kn1x1.1} parent=1 // loop_header_branch
      %14 = sbr.rel (%p12) target = $region8
    $region5: #{trans_block_kn1x1.1} parent=1 // loop_body
      %s16 = ssub.s32 %s11, 1
      %s17 = ssub.s32 %s11, 2
      %s24 = sadd.s32 1, %s19
      %p25 = scmp.ge.s32.totalorder %s24, 1
      %s26 = scalar_select %p25, 0, %s24
      %s27 = sadd.s32 1, %s18
      %s28 = scalar_select %p25, %s27, %s18
      %p29 = scmp.ge.s32.totalorder %s28, 2
      %s30 = scalar_select %p29, 0, %s28
      %s31 = ssub.s32 %s18, %s30
      %s32 = ssub.s32 %s19, %s26
      %s33 = sor.u32 %s31, %s32
      %p34 = scmp.eq.s32.totalorder %s33, 0
      %s36 = sadd.s32 %s35, 1
      %s37 = scalar_select %p34, %s35, %s36
      %p40 = pneg %p34
      %p41 = scmp.eq.s32.totalorder %s11, 1
      %p42 = por %p40, %p41
      %p43 = scmp.ne.s32.totalorder %s35, %s38
      %p44 = scmp.eq.s32.totalorder %s11, 0
      %p45 = por %p43, %p44
      %p46 = scmp.ne.s32.totalorder %s35, %s38
      %p47 = scmp.eq.s32.totalorder %s16, 1
      %p48 = por %p46, %p47
      %p49 = scmp.ne.s32.totalorder %s38, %s39
      %p50 = scmp.eq.s32.totalorder %s16, 0
      %p51 = por %p49, %p50
      %p52 = scmp.ne.s32.totalorder %s38, %s39
      %p53 = scmp.eq.s32.totalorder %s17, 1
      %p54 = por %p52, %p53
      %p56 = scmp.ne.s32.totalorder %s39, %s55
      %p57 = scmp.eq.s32.totalorder %s17, 0
      %p58 = por %p56, %p57
      %s60 = sadd.s32 %s59, 1
      %p63 = scmp.eq.s32.totalorder %s11, 1
      %p64 = scmp.ne.s32.totalorder %s59, %s61
      %p65 = scmp.eq.s32.totalorder %s11, 0
      %p66 = por %p64, %p65
      %p67 = scmp.ne.s32.totalorder %s59, %s61
      %p68 = scmp.eq.s32.totalorder %s16, 1
      %p69 = por %p67, %p68
      %p70 = scmp.ne.s32.totalorder %s61, %s62
      %p71 = scmp.eq.s32.totalorder %s16, 0
      %p72 = por %p70, %p71
      %p73 = scmp.ne.s32.totalorder %s61, %s62
      %p74 = scmp.eq.s32.totalorder %s17, 1
      %p75 = por %p73, %p74
      %p77 = scmp.ne.s32.totalorder %s62, %s76
      %p78 = scmp.eq.s32.totalorder %s17, 0
      %p79 = por %p77, %p78
      %s81 = sadd.s32 %s80, 1
      %p84 = scmp.eq.s32.totalorder %s11, 1
      %p85 = scmp.ne.s32.totalorder %s80, %s82
      %p86 = scmp.eq.s32.totalorder %s11, 0
      %p87 = por %p85, %p86
      %p88 = scmp.ne.s32.totalorder %s80, %s82
      %p89 = scmp.eq.s32.totalorder %s16, 1
      %p90 = por %p88, %p89
      %p91 = scmp.ne.s32.totalorder %s82, %s83
      %p92 = scmp.eq.s32.totalorder %s16, 0
      %p93 = por %p91, %p92
      %p94 = scmp.ne.s32.totalorder %s82, %s83
      %p95 = scmp.eq.s32.totalorder %s17, 1
      %p96 = por %p94, %p95
      %p98 = scmp.ne.s32.totalorder %s83, %s97
      %p99 = scmp.eq.s32.totalorder %s17, 0
      %p100 = por %p98, %p99
      %s101 = ssub.s32 %s18, %s30
      %s102 = ssub.s32 %s19, %s26
      %s103 = sor.u32 %s101, %s102
      %p104 = scmp.eq.s32.totalorder %s103, 0
      %s106 = sadd.s32 %s105, 1
      %s107 = scalar_select %p104, %s105, %s106
      %p110 = pneg %p104
      %p111 = scmp.eq.s32.totalorder %s11, 1
      %p112 = por %p110, %p111
      %p113 = scmp.ne.s32.totalorder %s105, %s108
      %p114 = scmp.eq.s32.totalorder %s11, 0
      %p115 = por %p113, %p114
      %p116 = scmp.ne.s32.totalorder %s105, %s108
      %p117 = scmp.eq.s32.totalorder %s16, 1
      %p118 = por %p116, %p117
      %p119 = scmp.ne.s32.totalorder %s108, %s109
      %p120 = scmp.eq.s32.totalorder %s16, 0
      %p121 = por %p119, %p120
      %p122 = scmp.ne.s32.totalorder %s108, %s109
      %p123 = scmp.eq.s32.totalorder %s17, 1
      %p124 = por %p122, %p123
      %p126 = scmp.ne.s32.totalorder %s109, %s125
      %p127 = scmp.eq.s32.totalorder %s17, 0
      %p128 = por %p126, %p127
      %p129 = scmp.le.s32.totalorder 1, %s11
      %p130 = scmp.lt.s32.totalorder %s11, 3
      %p131 = pnand %p129, %p130
      %p132 = pneg %p131
      // Predicated region
      $region9: #{trans_block_kn1x1.1} parent=5 // pred_check
        _
      $region10: #{trans_block_kn1x1.1} parent=5 // pred_check_branch
        %134 = sbr.rel (%p131) target = $region12
      $region11: #{trans_block_kn1x1.1} parent=5 // pred_region
        %s135 = ssub.s32 %s11, 1
        // Predicated region
        $region13: #{trans_block_kn1x1.1} parent=11 // pred_check
          %p136 = pneg %p72
        $region14: #{trans_block_kn1x1.1} parent=11 // pred_check_branch
          %138 = sbr.rel (%p136) target = $region16
        $region15: #{trans_block_kn1x1.1} parent=11 // pred_region
          %s140 = ssub.s32 16, 16
          %141 = vsyncadd [#allocation3], %s140
          %s143 = sshll.u32 %s1, 4
          %s144 = int_to_ptr.vmem [resolvable:$true] %s143
          %146 = dma.vmem_to_smem %s144, 16, [#allocation2], [#allocation3]
        $region16: #{trans_block_kn1x1.1} parent=11 // pred_fallthru
          _
        // Predicated region
        $region17: #{trans_block_kn1x1.1} parent=11 // pred_check
          %p147 = pneg %p93
        $region18: #{trans_block_kn1x1.1} parent=11 // pred_check_branch
          %149 = sbr.rel (%p147) target = $region20
        $region19: #{trans_block_kn1x1.1} parent=11 // pred_region
          %s151 = ssub.s32 16, 16
          %152 = vsyncadd [#allocation5], %s151
          %s154 = sshll.u32 %s2, 4
          %s155 = int_to_ptr.vmem [resolvable:$true] %s154
          %157 = dma.vmem_to_smem %s155, 16, [#allocation4], [#allocation5]
        $region20: #{trans_block_kn1x1.1} parent=11 // pred_fallthru
          _
      $region12: #{trans_block_kn1x1.1} parent=5 // pred_fallthru
        _
      %p158 = scmp.lt.s32.totalorder %s11, 2
      // Predicated region
      $region21: #{trans_block_kn1x1.1} parent=5 // pred_check
        %p159 = pneg %p158
      $region22: #{trans_block_kn1x1.1} parent=5 // pred_check_branch
        %161 = sbr.rel (%p159) target = $region24
      $region23: #{trans_block_kn1x1.1} parent=5 // pred_region
        // Predicated region
        $region25: #{trans_block_kn1x1.1} parent=23 // pred_check
          %p162 = pneg %p45
        $region26: #{trans_block_kn1x1.1} parent=23 // pred_check_branch
          %164 = sbr.rel (%p162) target = $region28
        $region27: #{trans_block_kn1x1.1} parent=23 // pred_region
          %p165 = scmp.lt.s32.totalorder %s18, 1
          %s166 = scalar_select %p165, %s18, 1
          %p167 = scmp.lt.s32.totalorder %s19, 0
          %s168 = scalar_select %p167, %s19, 0
          %s169 = smul.addr %s166, 16
          %s170 = sadd.s32 %s168, %s169
          %s171 = scalar_lea.vmem %s0, %s170
        $region28: #{trans_block_kn1x1.1} parent=23 // pred_fallthru
          _
      $region24: #{trans_block_kn1x1.1} parent=5 // pred_fallthru
        _
      %p172 = scmp.le.s32.totalorder 1, %s11
      %p173 = scmp.lt.s32.totalorder %s11, 3
      %p174 = pnand %p172, %p173
      %p175 = pneg %p174
      // Predicated region
      $region29: #{trans_block_kn1x1.1} parent=5 // pred_check
        _
      $region30: #{trans_block_kn1x1.1} parent=5 // pred_check_branch
        %177 = sbr.rel (%p174) target = $region32
      $region31: #{trans_block_kn1x1.1} parent=5 // pred_region
        %s178 = ssub.s32 %s11, 1
        // Predicated region
        $region33: #{trans_block_kn1x1.1} parent=31 // pred_check
          %p179 = pneg %p72
        $region34: #{trans_block_kn1x1.1} parent=31 // pred_check_branch
          %181 = sbr.rel (%p179) target = $region36
        $region35: #{trans_block_kn1x1.1} parent=31 // pred_region
          %182 = dma.done [#allocation3], 16
        $region36: #{trans_block_kn1x1.1} parent=31 // pred_fallthru
          _
        // Predicated region
        $region37: #{trans_block_kn1x1.1} parent=31 // pred_check
          %p183 = pneg %p93
        $region38: #{trans_block_kn1x1.1} parent=31 // pred_check_branch
          %185 = sbr.rel (%p183) target = $region40
        $region39: #{trans_block_kn1x1.1} parent=31 // pred_region
          %186 = dma.done [#allocation5], 16
        $region40: #{trans_block_kn1x1.1} parent=31 // pred_fallthru
          _
        %187 = sfence
        %p188 = scmp.lt.s32.totalorder %s20, 1
        %s189 = scalar_select %p188, %s20, 1
        %p190 = scmp.lt.s32.totalorder %s21, 0
        %s191 = scalar_select %p190, %s21, 0
        %s192 = smul.addr %s189, 16
        %s193 = sadd.s32 %s191, %s192
        %s194 = scalar_lea.vmem %s0, %s193
        %p195 = pneg %p51
        %p196 = pneg %p48
        %p197 = pneg %p72
        %p198 = pneg %p69
        %p199 = pneg %p93
        %p200 = pneg %p90
        %p201 = pneg %p121
        %p202 = pneg %p118
        %p203 = scmp.lt.s32.totalorder %s20, 1
        %s204 = scalar_select %p203, %s20, 1
        %p205 = scmp.lt.s32.totalorder %s21, 0
        %s206 = scalar_select %p205, %s21, 0
        %s207 = smul.addr %s204, 8
        %s208 = sadd.s32 %s206, %s207
        %s209 = scalar_lea.vmem %s3, %s208
        %p210 = scmp.lt.s32.totalorder %s20, 1
        %s211 = scalar_select %p210, %s20, 1
        %p212 = scmp.lt.s32.totalorder %s21, 0
        %s213 = scalar_select %p212, %s21, 0
        %s214 = smul.addr %s211, 16
        %s215 = sadd.s32 %s213, %s214
        %s216 = scalar_lea.vmem %s0, %s215
        %p217 = scmp.lt.s32.totalorder %s20, 1
        %s218 = scalar_select %p217, %s20, 1
        %p219 = scmp.lt.s32.totalorder %s21, 0
        %s220 = scalar_select %p219, %s21, 0
        %s221 = smul.addr %s218, 8
        %s222 = sadd.s32 %s220, %s221
        %s223 = scalar_lea.vmem %s3, %s222
        %s224 = sld [smem:[#allocation2]]
        %s225 = sld [smem:[#allocation2 + $0x1]]
        %s226 = sld [smem:[#allocation2 + $0x2]]
        %s227 = sld [smem:[#allocation2 + $0x3]]
        %s228 = sld [smem:[#allocation2 + $0x4]]
        %s229 = sld [smem:[#allocation2 + $0x5]]
        %s230 = sld [smem:[#allocation2 + $0x6]]
        %s231 = sld [smem:[#allocation2 + $0x7]]
        %s232 = sld [smem:[#allocation2 + $0x8]]
        %s233 = sld [smem:[#allocation2 + $0x9]]
        %s234 = sld [smem:[#allocation2 + $0xa]]
        %s235 = sld [smem:[#allocation2 + $0xb]]
        %s236 = sld [smem:[#allocation2 + $0xc]]
        %s237 = sld [smem:[#allocation2 + $0xd]]
        %s238 = sld [smem:[#allocation2 + $0xe]]
        %s239 = sld [smem:[#allocation2 + $0xf]]
        %s240 = sld [smem:[#allocation2 + $0x10]]
        %s241 = sld [smem:[#allocation2 + $0x11]]
        %s242 = sld [smem:[#allocation2 + $0x12]]
        %s243 = sld [smem:[#allocation2 + $0x13]]
        %s244 = sld [smem:[#allocation2 + $0x14]]
        %s245 = sld [smem:[#allocation2 + $0x15]]
        %s246 = sld [smem:[#allocation2 + $0x16]]
        %s247 = sld [smem:[#allocation2 + $0x17]]
        %s248 = sld [smem:[#allocation2 + $0x18]]
        %s249 = sld [smem:[#allocation2 + $0x19]]
        %s250 = sld [smem:[#allocation2 + $0x1a]]
        %s251 = sld [smem:[#allocation2 + $0x1b]]
        %s252 = sld [smem:[#allocation2 + $0x1c]]
        %s253 = sld [smem:[#allocation2 + $0x1d]]
        %s254 = sld [smem:[#allocation2 + $0x1e]]
        %s255 = sld [smem:[#allocation2 + $0x1f]]
        %v256 = vld [vmem:[%s216] sm:$0x1]
        %v257 = vmax.f32 %v256, 0.0
        %s258 = scalar_lea.vmem %s216, 1
        %v259 = vld [vmem:[%s258] sm:$0x1]
        %v260 = vmax.f32 %v259, 0.0
        %s261 = scalar_lea.vmem %s216, 2
        %v262 = vld [vmem:[%s261] sm:$0x1]
        %v263 = vmax.f32 %v262, 0.0
        %s264 = scalar_lea.vmem %s216, 3
        %v265 = vld [vmem:[%s264] sm:$0x1]
        %v266 = vmax.f32 %v265, 0.0
        %v267 = vadd.f32 %v257, %v260
        %v268 = vadd.f32 %v267, %v263
        %v269 = vadd.f32 %v268, %v266
        %v270 = vmul.f32 %v269, 0.25
        %v271 = vsub.f32 %v257, %v270
        %v272 = vsub.f32 %v260, %v270
        %v273 = vsub.f32 %v263, %v270
        %v274 = vsub.f32 %v266, %v270
        %v275 = vmul.f32 %v271, %v271
        %v276 = vmul.f32 %v272, %v272
        %v277 = vadd.f32 %v275, %v276
        %v278 = vmul.f32 %v273, %v273
        %v279 = vadd.f32 %v277, %v278
        %v280 = vmul.f32 %v274, %v274
        %v281 = vadd.f32 %v279, %v280
        %v282 = vmul.f32 %v281, 0.25
        %v283 = vadd.f32 %v282, 1e-05
        %v284 = vrsqrt.pop %v283
        %v285 = vmul.f32 %v271, %v284
        %v286 = vmul.f32 %v272, %v284
        %v287 = vmul.f32 %v273, %v284
        %v288 = vmul.f32 %v274, %v284
        %v289 = vstv %s224
        %v290 = vmul.f32 %v289, %v285
        %v291 = vstv %s225
        %v292 = vmul.f32 %v291, %v286
        %v293 = vadd.f32 %v290, %v292
        %v294 = vstv %s226
        %v295 = vmul.f32 %v294, %v287
        %v296 = vadd.f32 %v293, %v295
        %v297 = vstv %s227
        %v298 = vmul.f32 %v297, %v288
        %v299 = vadd.f32 %v296, %v298
        %v300 = vstv %s228
        %v301 = vmul.f32 %v300, %v285
        %v302 = vstv %s229
        %v303 = vmul.f32 %v302, %v286
        %v304 = vadd.f32 %v301, %v303
        %v305 = vstv %s230
        %v306 = vmul.f32 %v305, %v287
        %v307 = vadd.f32 %v304, %v306
        %v308 = vstv %s231
        %v309 = vmul.f32 %v308, %v288
        %v310 = vadd.f32 %v307, %v309
        %v311 = vstv %s232
        %v312 = vmul.f32 %v311, %v285
        %v313 = vstv %s233
        %v314 = vmul.f32 %v313, %v286
        %v315 = vadd.f32 %v312, %v314
        %v316 = vstv %s234
        %v317 = vmul.f32 %v316, %v287
        %v318 = vadd.f32 %v315, %v317
        %v319 = vstv %s235
        %v320 = vmul.f32 %v319, %v288
        %v321 = vadd.f32 %v318, %v320
        %v322 = vstv %s236
        %v323 = vmul.f32 %v322, %v285
        %v324 = vstv %s237
        %v325 = vmul.f32 %v324, %v286
        %v326 = vadd.f32 %v323, %v325
        %v327 = vstv %s238
        %v328 = vmul.f32 %v327, %v287
        %v329 = vadd.f32 %v326, %v328
        %v330 = vstv %s239
        %v331 = vmul.f32 %v330, %v288
        %v332 = vadd.f32 %v329, %v331
        %v333 = vstv %s240
        %v334 = vmul.f32 %v333, %v285
        %v335 = vstv %s241
        %v336 = vmul.f32 %v335, %v286
        %v337 = vadd.f32 %v334, %v336
        %v338 = vstv %s242
        %v339 = vmul.f32 %v338, %v287
        %v340 = vadd.f32 %v337, %v339
        %v341 = vstv %s243
        %v342 = vmul.f32 %v341, %v288
        %v343 = vadd.f32 %v340, %v342
        %v344 = vstv %s244
        %v345 = vmul.f32 %v344, %v285
        %v346 = vstv %s245
        %v347 = vmul.f32 %v346, %v286
        %v348 = vadd.f32 %v345, %v347
        %v349 = vstv %s246
        %v350 = vmul.f32 %v349, %v287
        %v351 = vadd.f32 %v348, %v350
        %v352 = vstv %s247
        %v353 = vmul.f32 %v352, %v288
        %v354 = vadd.f32 %v351, %v353
        %v355 = vstv %s248
        %v356 = vmul.f32 %v355, %v285
        %v357 = vstv %s249
        %v358 = vmul.f32 %v357, %v286
        %v359 = vadd.f32 %v356, %v358
        %v360 = vstv %s250
        %v361 = vmul.f32 %v360, %v287
        %v362 = vadd.f32 %v359, %v361
        %v363 = vstv %s251
        %v364 = vmul.f32 %v363, %v288
        %v365 = vadd.f32 %v362, %v364
        %v366 = vstv %s252
        %v367 = vmul.f32 %v366, %v285
        %v368 = vstv %s253
        %v369 = vmul.f32 %v368, %v286
        %v370 = vadd.f32 %v367, %v369
        %v371 = vstv %s254
        %v372 = vmul.f32 %v371, %v287
        %v373 = vadd.f32 %v370, %v372
        %v374 = vstv %s255
        %v375 = vmul.f32 %v374, %v288
        %v376 = vadd.f32 %v373, %v375
        %s377 = scalar_lea.vmem %s216, 4
        %v378 = vld [vmem:[%s377] sm:$0x1]
        %v379 = vmax.f32 %v378, 0.0
        %s380 = scalar_lea.vmem %s216, 5
        %v381 = vld [vmem:[%s380] sm:$0x1]
        %v382 = vmax.f32 %v381, 0.0
        %s383 = scalar_lea.vmem %s216, 6
        %v384 = vld [vmem:[%s383] sm:$0x1]
        %v385 = vmax.f32 %v384, 0.0
        %s386 = scalar_lea.vmem %s216, 7
        %v387 = vld [vmem:[%s386] sm:$0x1]
        %v388 = vmax.f32 %v387, 0.0
        %v389 = vadd.f32 %v379, %v382
        %v390 = vadd.f32 %v389, %v385
        %v391 = vadd.f32 %v390, %v388
        %v392 = vmul.f32 %v391, 0.25
        %v393 = vsub.f32 %v379, %v392
        %v394 = vsub.f32 %v382, %v392
        %v395 = vsub.f32 %v385, %v392
        %v396 = vsub.f32 %v388, %v392
        %v397 = vmul.f32 %v393, %v393
        %v398 = vmul.f32 %v394, %v394
        %v399 = vadd.f32 %v397, %v398
        %v400 = vmul.f32 %v395, %v395
        %v401 = vadd.f32 %v399, %v400
        %v402 = vmul.f32 %v396, %v396
        %v403 = vadd.f32 %v401, %v402
        %v404 = vmul.f32 %v403, 0.25
        %v405 = vadd.f32 %v404, 1e-05
        %v406 = vrsqrt.pop %v405
        %v407 = vmul.f32 %v393, %v406
        %v408 = vmul.f32 %v394, %v406
        %v409 = vmul.f32 %v395, %v406
        %v410 = vmul.f32 %v396, %v406
        %v411 = vmul.f32 %v289, %v407
        %v412 = vmul.f32 %v291, %v408
        %v413 = vadd.f32 %v411, %v412
        %v414 = vmul.f32 %v294, %v409
        %v415 = vadd.f32 %v413, %v414
        %v416 = vmul.f32 %v297, %v410
        %v417 = vadd.f32 %v415, %v416
        %v418 = vmax.f32 %v299, %v417
        %v419 = vmul.f32 %v300, %v407
        %v420 = vmul.f32 %v302, %v408
        %v421 = vadd.f32 %v419, %v420
        %v422 = vmul.f32 %v305, %v409
        %v423 = vadd.f32 %v421, %v422
        %v424 = vmul.f32 %v308, %v410
        %v425 = vadd.f32 %v423, %v424
        %v426 = vmax.f32 %v310, %v425
        %v427 = vmul.f32 %v311, %v407
        %v428 = vmul.f32 %v313, %v408
        %v429 = vadd.f32 %v427, %v428
        %v430 = vmul.f32 %v316, %v409
        %v431 = vadd.f32 %v429, %v430
        %v432 = vmul.f32 %v319, %v410
        %v433 = vadd.f32 %v431, %v432
        %v434 = vmax.f32 %v321, %v433
        %v435 = vmul.f32 %v322, %v407
        %v436 = vmul.f32 %v324, %v408
        %v437 = vadd.f32 %v435, %v436
        %v438 = vmul.f32 %v327, %v409
        %v439 = vadd.f32 %v437, %v438
        %v440 = vmul.f32 %v330, %v410
        %v441 = vadd.f32 %v439, %v440
        %v442 = vmax.f32 %v332, %v441
        %v443 = vmul.f32 %v333, %v407
        %v444 = vmul.f32 %v335, %v408
        %v445 = vadd.f32 %v443, %v444
        %v446 = vmul.f32 %v338, %v409
        %v447 = vadd.f32 %v445, %v446
        %v448 = vmul.f32 %v341, %v410
        %v449 = vadd.f32 %v447, %v448
        %v450 = vmax.f32 %v343, %v449
        %v451 = vmul.f32 %v344, %v407
        %v452 = vmul.f32 %v346, %v408
        %v453 = vadd.f32 %v451, %v452
        %v454 = vmul.f32 %v349, %v409
        %v455 = vadd.f32 %v453, %v454
        %v456 = vmul.f32 %v352, %v410
        %v457 = vadd.f32 %v455, %v456
        %v458 = vmax.f32 %v354, %v457
        %v459 = vmul.f32 %v355, %v407
        %v460 = vmul.f32 %v357, %v408
        %v461 = vadd.f32 %v459, %v460
        %v462 = vmul.f32 %v360, %v409
        %v463 = vadd.f32 %v461, %v462
        %v464 = vmul.f32 %v363, %v410
        %v465 = vadd.f32 %v463, %v464
        %v466 = vmax.f32 %v365, %v465
        %v467 = vmul.f32 %v366, %v407
        %v468 = vmul.f32 %v368, %v408
        %v469 = vadd.f32 %v467, %v468
        %v470 = vmul.f32 %v371, %v409
        %v471 = vadd.f32 %v469, %v470
        %v472 = vmul.f32 %v374, %v410
        %v473 = vadd.f32 %v471, %v472
        %v474 = vmax.f32 %v376, %v473
        %s475 = scalar_lea.vmem %s216, 8
        %v476 = vld [vmem:[%s475] sm:$0x1]
        %v477 = vmax.f32 %v476, 0.0
        %s478 = scalar_lea.vmem %s216, 9
        %v479 = vld [vmem:[%s478] sm:$0x1]
        %v480 = vmax.f32 %v479, 0.0
        %s481 = scalar_lea.vmem %s216, 10
        %v482 = vld [vmem:[%s481] sm:$0x1]
        %v483 = vmax.f32 %v482, 0.0
        %s484 = scalar_lea.vmem %s216, 11
        %v485 = vld [vmem:[%s484] sm:$0x1]
        %v486 = vmax.f32 %v485, 0.0
        %v487 = vadd.f32 %v477, %v480
        %v488 = vadd.f32 %v487, %v483
        %v489 = vadd.f32 %v488, %v486
        %v490 = vmul.f32 %v489, 0.25
        %v491 = vsub.f32 %v477, %v490
        %v492 = vsub.f32 %v480, %v490
        %v493 = vsub.f32 %v483, %v490
        %v494 = vsub.f32 %v486, %v490
        %v495 = vmul.f32 %v491, %v491
        %v496 = vmul.f32 %v492, %v492
        %v497 = vadd.f32 %v495, %v496
        %v498 = vmul.f32 %v493, %v493
        %v499 = vadd.f32 %v497, %v498
        %v500 = vmul.f32 %v494, %v494
        %v501 = vadd.f32 %v499, %v500
        %v502 = vmul.f32 %v501, 0.25
        %v503 = vadd.f32 %v502, 1e-05
        %v504 = vrsqrt.pop %v503
        %v505 = vmul.f32 %v491, %v504
        %v506 = vmul.f32 %v492, %v504
        %v507 = vmul.f32 %v493, %v504
        %v508 = vmul.f32 %v494, %v504
        %v509 = vmul.f32 %v289, %v505
        %v510 = vmul.f32 %v291, %v506
        %v511 = vadd.f32 %v509, %v510
        %v512 = vmul.f32 %v294, %v507
        %v513 = vadd.f32 %v511, %v512
        %v514 = vmul.f32 %v297, %v508
        %v515 = vadd.f32 %v513, %v514
        %v516 = vmax.f32 %v418, %v515
        %v517 = vmul.f32 %v300, %v505
        %v518 = vmul.f32 %v302, %v506
        %v519 = vadd.f32 %v517, %v518
        %v520 = vmul.f32 %v305, %v507
        %v521 = vadd.f32 %v519, %v520
        %v522 = vmul.f32 %v308, %v508
        %v523 = vadd.f32 %v521, %v522
        %v524 = vmax.f32 %v426, %v523
        %v525 = vmul.f32 %v311, %v505
        %v526 = vmul.f32 %v313, %v506
        %v527 = vadd.f32 %v525, %v526
        %v528 = vmul.f32 %v316, %v507
        %v529 = vadd.f32 %v527, %v528
        %v530 = vmul.f32 %v319, %v508
        %v531 = vadd.f32 %v529, %v530
        %v532 = vmax.f32 %v434, %v531
        %v533 = vmul.f32 %v322, %v505
        %v534 = vmul.f32 %v324, %v506
        %v535 = vadd.f32 %v533, %v534
        %v536 = vmul.f32 %v327, %v507
        %v537 = vadd.f32 %v535, %v536
        %v538 = vmul.f32 %v330, %v508
        %v539 = vadd.f32 %v537, %v538
        %v540 = vmax.f32 %v442, %v539
        %v541 = vmul.f32 %v333, %v505
        %v542 = vmul.f32 %v335, %v506
        %v543 = vadd.f32 %v541, %v542
        %v544 = vmul.f32 %v338, %v507
        %v545 = vadd.f32 %v543, %v544
        %v546 = vmul.f32 %v341, %v508
        %v547 = vadd.f32 %v545, %v546
        %v548 = vmax.f32 %v450, %v547
        %v549 = vmul.f32 %v344, %v505
        %v550 = vmul.f32 %v346, %v506
        %v551 = vadd.f32 %v549, %v550
        %v552 = vmul.f32 %v349, %v507
        %v553 = vadd.f32 %v551, %v552
        %v554 = vmul.f32 %v352, %v508
        %v555 = vadd.f32 %v553, %v554
        %v556 = vmax.f32 %v458, %v555
        %v557 = vmul.f32 %v355, %v505
        %v558 = vmul.f32 %v357, %v506
        %v559 = vadd.f32 %v557, %v558
        %v560 = vmul.f32 %v360, %v507
        %v561 = vadd.f32 %v559, %v560
        %v562 = vmul.f32 %v363, %v508
        %v563 = vadd.f32 %v561, %v562
        %v564 = vmax.f32 %v466, %v563
        %v565 = vmul.f32 %v366, %v505
        %v566 = vmul.f32 %v368, %v506
        %v567 = vadd.f32 %v565, %v566
        %v568 = vmul.f32 %v371, %v507
        %v569 = vadd.f32 %v567, %v568
        %v570 = vmul.f32 %v374, %v508
        %v571 = vadd.f32 %v569, %v570
        %v572 = vmax.f32 %v474, %v571
        %s573 = scalar_lea.vmem %s216, 12
        %v574 = vld [vmem:[%s573] sm:$0x1]
        %v575 = vmax.f32 %v574, 0.0
        %s576 = scalar_lea.vmem %s216, 13
        %v577 = vld [vmem:[%s576] sm:$0x1]
        %v578 = vmax.f32 %v577, 0.0
        %s579 = scalar_lea.vmem %s216, 14
        %v580 = vld [vmem:[%s579] sm:$0x1]
        %v581 = vmax.f32 %v580, 0.0
        %s582 = scalar_lea.vmem %s216, 15
        %v583 = vld [vmem:[%s582] sm:$0x1]
        %v584 = vmax.f32 %v583, 0.0
        %v585 = vadd.f32 %v575, %v578
        %v586 = vadd.f32 %v585, %v581
        %v587 = vadd.f32 %v586, %v584
        %v588 = vmul.f32 %v587, 0.25
        %v589 = vsub.f32 %v575, %v588
        %v590 = vsub.f32 %v578, %v588
        %v591 = vsub.f32 %v581, %v588
        %v592 = vsub.f32 %v584, %v588
        %v593 = vmul.f32 %v589, %v589
        %v594 = vmul.f32 %v590, %v590
        %v595 = vadd.f32 %v593, %v594
        %v596 = vmul.f32 %v591, %v591
        %v597 = vadd.f32 %v595, %v596
        %v598 = vmul.f32 %v592, %v592
        %v599 = vadd.f32 %v597, %v598
        %v600 = vmul.f32 %v599, 0.25
        %v601 = vadd.f32 %v600, 1e-05
        %v602 = vrsqrt.pop %v601
        %v603 = vmul.f32 %v589, %v602
        %v604 = vmul.f32 %v590, %v602
        %v605 = vmul.f32 %v591, %v602
        %v606 = vmul.f32 %v592, %v602
        %v607 = vmul.f32 %v289, %v603
        %v608 = vmul.f32 %v291, %v604
        %v609 = vadd.f32 %v607, %v608
        %v610 = vmul.f32 %v294, %v605
        %v611 = vadd.f32 %v609, %v610
        %v612 = vmul.f32 %v297, %v606
        %v613 = vadd.f32 %v611, %v612
        %v614 = vmax.f32 %v516, %v613
        %v615 = vmul.f32 %v300, %v603
        %v616 = vmul.f32 %v302, %v604
        %v617 = vadd.f32 %v615, %v616
        %v618 = vmul.f32 %v305, %v605
        %v619 = vadd.f32 %v617, %v618
        %v620 = vmul.f32 %v308, %v606
        %v621 = vadd.f32 %v619, %v620
        %v622 = vmax.f32 %v524, %v621
        %v623 = vmul.f32 %v311, %v603
        %v624 = vmul.f32 %v313, %v604
        %v625 = vadd.f32 %v623, %v624
        %v626 = vmul.f32 %v316, %v605
        %v627 = vadd.f32 %v625, %v626
        %v628 = vmul.f32 %v319, %v606
        %v629 = vadd.f32 %v627, %v628
        %v630 = vmax.f32 %v532, %v629
        %v631 = vmul.f32 %v322, %v603
        %v632 = vmul.f32 %v324, %v604
        %v633 = vadd.f32 %v631, %v632
        %v634 = vmul.f32 %v327, %v605
        %v635 = vadd.f32 %v633, %v634
        %v636 = vmul.f32 %v330, %v606
        %v637 = vadd.f32 %v635, %v636
        %v638 = vmax.f32 %v540, %v637
        %v639 = vmul.f32 %v333, %v603
        %v640 = vmul.f32 %v335, %v604
        %v641 = vadd.f32 %v639, %v640
        %v642 = vmul.f32 %v338, %v605
        %v643 = vadd.f32 %v641, %v642
        %v644 = vmul.f32 %v341, %v606
        %v645 = vadd.f32 %v643, %v644
        %v646 = vmax.f32 %v548, %v645
        %v647 = vmul.f32 %v344, %v603
        %v648 = vmul.f32 %v346, %v604
        %v649 = vadd.f32 %v647, %v648
        %v650 = vmul.f32 %v349, %v605
        %v651 = vadd.f32 %v649, %v650
        %v652 = vmul.f32 %v352, %v606
        %v653 = vadd.f32 %v651, %v652
        %v654 = vmax.f32 %v556, %v653
        %v655 = vmul.f32 %v355, %v603
        %v656 = vmul.f32 %v357, %v604
        %v657 = vadd.f32 %v655, %v656
        %v658 = vmul.f32 %v360, %v605
        %v659 = vadd.f32 %v657, %v658
        %v660 = vmul.f32 %v363, %v606
        %v661 = vadd.f32 %v659, %v660
        %v662 = vmax.f32 %v564, %v661
        %v663 = vmul.f32 %v366, %v603
        %v664 = vmul.f32 %v368, %v604
        %v665 = vadd.f32 %v663, %v664
        %v666 = vmul.f32 %v371, %v605
        %v667 = vadd.f32 %v665, %v666
        %v668 = vmul.f32 %v374, %v606
        %v669 = vadd.f32 %v667, %v668
        %v670 = vmax.f32 %v572, %v669
        %s671 = sld [smem:[#allocation4]]
        %v672 = vstv %s671
        %v673 = vadd.f32 %v614, %v672
        %674 = vst [vmem:[%s223] sm:$0x1] %v673
        %s675 = sld [smem:[#allocation4 + $0x1]]
        %v676 = vstv %s675
        %v677 = vadd.f32 %v622, %v676
        %s678 = scalar_lea.vmem %s223, 1
        %679 = vst [vmem:[%s678] sm:$0x1] %v677
        %s680 = sld [smem:[#allocation4 + $0x2]]
        %v681 = vstv %s680
        %v682 = vadd.f32 %v630, %v681
        %s683 = scalar_lea.vmem %s223, 2
        %684 = vst [vmem:[%s683] sm:$0x1] %v682
        %s685 = sld [smem:[#allocation4 + $0x3]]
        %v686 = vstv %s685
        %v687 = vadd.f32 %v638, %v686
        %s688 = scalar_lea.vmem %s223, 3
        %689 = vst [vmem:[%s688] sm:$0x1] %v687
        %s690 = sld [smem:[#allocation4 + $0x4]]
        %v691 = vstv %s690
        %v692 = vadd.f32 %v646, %v691
        %s693 = scalar_lea.vmem %s223, 4
        %694 = vst [vmem:[%s693] sm:$0x1] %v692
        %s695 = sld [smem:[#allocation4 + $0x5]]
        %v696 = vstv %s695
        %v697 = vadd.f32 %v654, %v696
        %s698 = scalar_lea.vmem %s223, 5
        %699 = vst [vmem:[%s698] sm:$0x1] %v697
        %s700 = sld [smem:[#allocation4 + $0x6]]
        %v701 = vstv %s700
        %v702 = vadd.f32 %v662, %v701
        %s703 = scalar_lea.vmem %s223, 6
        %704 = vst [vmem:[%s703] sm:$0x1] %v702
        %s705 = sld [smem:[#allocation4 + $0x7]]
        %v706 = vstv %s705
        %v707 = vadd.f32 %v670, %v706
        %s708 = scalar_lea.vmem %s223, 7
        %709 = vst [vmem:[%s708] sm:$0x1] %v707
        %p710 = scmp.lt.s32.totalorder %s20, 1
        %s711 = scalar_select %p710, %s20, 1
        %p712 = scmp.lt.s32.totalorder %s21, 0
        %s713 = scalar_select %p712, %s21, 0
        %s714 = smul.addr %s711, 8
        %s715 = sadd.s32 %s713, %s714
        %s716 = scalar_lea.vmem %s3, %s715
        // Predicated region
        $region41: #{trans_block_kn1x1.1} parent=31 // pred_check
          %p717 = pneg %p118
        $region42: #{trans_block_kn1x1.1} parent=31 // pred_check_branch
          %719 = sbr.rel (%p717) target = $region44
        $region43: #{trans_block_kn1x1.1} parent=31 // pred_region
          _
        $region44: #{trans_block_kn1x1.1} parent=31 // pred_fallthru
          _
      $region32: #{trans_block_kn1x1.1} parent=5 // pred_fallthru
        _
      %p720 = scmp.le.s32.totalorder 2, %s11
      // Predicated region
      $region45: #{trans_block_kn1x1.1} parent=5 // pred_check
        %p721 = pneg %p720
      $region46: #{trans_block_kn1x1.1} parent=5 // pred_check_branch
        %723 = sbr.rel (%p721) target = $region48
      $region47: #{trans_block_kn1x1.1} parent=5 // pred_region
        %s724 = ssub.s32 %s11, 2
        // Predicated region
        $region49: #{trans_block_kn1x1.1} parent=47 // pred_check
          %p725 = pneg %p124
        $region50: #{trans_block_kn1x1.1} parent=47 // pred_check_branch
          %727 = sbr.rel (%p725) target = $region52
        $region51: #{trans_block_kn1x1.1} parent=47 // pred_region
          %p728 = scmp.lt.s32.totalorder %s22, 1
          %s729 = scalar_select %p728, %s22, 1
          %p730 = scmp.lt.s32.totalorder %s23, 0
          %s731 = scalar_select %p730, %s23, 0
          %s732 = smul.addr %s729, 8
          %s733 = sadd.s32 %s731, %s732
          %s734 = scalar_lea.vmem %s3, %s733
        $region52: #{trans_block_kn1x1.1} parent=47 // pred_fallthru
          _
      $region48: #{trans_block_kn1x1.1} parent=5 // pred_fallthru
        _
    $region6: #{trans_block_kn1x1.1} parent=1 // loop_footer
      %s15 = sadd.s32 1, %s11
    $region7: #{trans_block_kn1x1.1} parent=1 // loop_footer_branch
      %10 = sbr.rel target = $region3
    $region8: #{trans_block_kn1x1.1} parent=1 // loop_exit
      _
    %735 = vsyncpa [#allocation3], 1
    %s736 = scalar_lea.sflag [#allocation3], 1
    %737 = vsyncpa %s736, 1
    %738 = vsyncpa [#allocation5], 1

</llo_original>
